<compile_context>
chip_gen: v5e
topology: v5e:2x2
jax: 0.10.0
libtpu: 0.0.40
codegen_flags: <defaults>
</compile_context>

<pallas_src>
import functools

import jax
import jax.numpy as jnp
from jax.experimental import pallas as pl
from jax.experimental.pallas import tpu as pltpu

N, H, W = 2, 16, 16
C_IN = 4
C_STAGE5 = 8          # simple_model.skip.outChannels['stage5'] (synthetic)
N_STEPS = 10
LR = 0.1


def _fused_kernel(x_ref, tri_ref, wbbT_ref, bbbT_ref, wskT_ref, wdecT_ref,
                  bdec_ref, alpha_ref, dl_ref, *, n, h, w, n_steps, lr):
    """x_ref:    (C_IN, P)         pixels-on-lanes input, P = n*h*w
       tri_ref:  (n*(h+2), w+2)    trimaps stacked on sublanes, pad value 0.5
       w*T_ref:  tiny transposed weights in VMEM: (C,4)/(C,1)/(1,1)
       alpha_ref:(1, P)            lane-dense output
       dl_ref:   (1, P)            VMEM scratch for the relayouted dL/dalpha."""
    hw = h * w

    # ---------------- Stage 1: trimap -> laplacian edge maps -----------------
    # Both batch images are processed in one shot: they are stacked along the
    # sublane (row) axis, each with its own 0.5-valued padding ring.  0.5
    # thresholds to pos = neg = 0, so the stencil never leaks across batches.
    tp = tri_ref[...]                                   # (n*(h+2), w+2)
    pos_p = (tp > 0.75).astype(jnp.float32)
    neg_p = (tp < 0.25).astype(jnp.float32)
    # separable ones(3,3) conv: horizontal 3-sum, then vertical 3-sum.
    rp = pos_p[:, 0:w] + pos_p[:, 1:w + 1] + pos_p[:, 2:w + 2]   # (n*(h+2), w)
    rn = neg_p[:, 0:w] + neg_p[:, 1:w + 1] + neg_p[:, 2:w + 2]
    rtot = n * (h + 2)
    np3 = rp[0:rtot - 2, :] + rp[1:rtot - 1, :] + rp[2:rtot, :]  # (rtot-2, w)
    nn3 = rn[0:rtot - 2, :] + rn[1:rtot - 1, :] + rn[2:rtot, :]

    pe_list, ne_list = [], []
    pos_sum, neg_sum = 0.0, 0.0
    for b in range(n):                                  # static batch loop
        r0 = b * (h + 2)
        pos = pos_p[r0 + 1:r0 + 1 + h, 1:1 + w]         # (h, w) interior
        neg = neg_p[r0 + 1:r0 + 1 + h, 1:1 + w]
        unknown = 1.0 - pos - neg
        # laplacian = ones(3,3) with center -8  =>  conv = (3x3 sum) - 9*center
        pe = jnp.abs(np3[r0:r0 + h, :] - 9.0 * pos) * unknown
        ne = jnp.abs(nn3[r0:r0 + h, :] - 9.0 * neg) * unknown
        pe_list.append(pe)
        ne_list.append(ne)
        pos_sum = pos_sum + jnp.sum(pe)
        neg_sum = neg_sum + jnp.sum(ne)
    inv_pos = 1.0 / (pos_sum + 0.1)                     # 1 / pos_pixel_number
    inv_neg = 1.0 / (neg_sum + 0.1)                     # 1 / neg_pixel_number

    # dL/dalpha is constant across the 10 steps (edge maps are detached in the
    # torch loss); relayout it once from spatial (h, w) to the lane-dense
    # (1, P) working layout via static row strips through VMEM scratch.
    for b in range(n):
        dl_b = ne_list[b] * inv_neg - pe_list[b] * inv_pos           # (h, w)
        for i in range(h):
            dl_ref[:, pl.ds(b * hw + i * w, w)] = dl_b[i:i + 1, :]
    dl = dl_ref[...]                                                 # (1, P)

    # ------------- Stage 2: synthetic backbone + skip, (C, P) layout ---------
    xv = x_ref[...]                                     # (4, P)
    wbbT = wbbT_ref[...]                                # (C, 4)
    wskT = wskT_ref[...]                                # (C, 4)
    c_in = xv.shape[0]
    # K=4 1x1 convs as VPU broadcast-FMAs (no MXU): (1,P) * (C,1) -> (C,P)
    enc = xv[0:1, :] * wbbT[:, 0:1]
    sk = xv[0:1, :] * wskT[:, 0:1]
    for i in range(1, c_in):
        enc = enc + xv[i:i + 1, :] * wbbT[:, i:i + 1]
        sk = sk + xv[i:i + 1, :] * wskT[:, i:i + 1]
    feat = jnp.maximum(enc + bbbT_ref[...], 0.0) + sk   # skip_out_orig['stage5']
    wdecT = wdecT_ref[...]                              # (C, 1)
    fw = feat * wdecT                                   # fold decoder weight once
    w2sum = jnp.sum(wdecT * wdecT)                      # sum_c w_c^2 (B gradient)

    # ------------- Stage 3: 10-step SGD on A, B (fully unrolled) -------------
    A = jnp.zeros((fw.shape[0], 1), jnp.float32)        # nn.init.zeros_
    bias = bdec_ref[...]                                # sum_c B_c*w_c + b_dec
    last_pre = None
    for step in range(n_steps):
        sig = jax.nn.sigmoid(A)                         # (C, 1), EUP
        two_sig = 2.0 * sig
        # decoder(skip * 2*sigmoid(A) + B) -> pre-activation alpha, (1, P)
        pre = jnp.sum(fw * two_sig, axis=0, keepdims=True) + bias
        last_pre = pre
        if step + 1 < n_steps:          # last update never affects the output
            # clamp(.,0,1) backward (torch: pass-through subgradient at bounds)
            gate = (pre >= 0.0) & (pre <= 1.0)
            g_pre = jnp.where(gate, dl, 0.0)            # (1, P)
            s = jnp.sum(fw * g_pre, axis=1, keepdims=True)           # (C, 1)
            A = A - lr * (s * (two_sig * (1.0 - sig)))
            bias = bias - lr * (jnp.sum(g_pre) * w2sum)
    # alpha from the last forward (A, B before their final update), clamped.
    alpha_ref[...] = jnp.clip(last_pre, 0.0, 1.0)


def test_time_model_forward(x, params):
    n, c, h, w_ = x.shape
    assert c == C_IN
    p = n * h * w_

    # Tiny XLA glue: NCHW -> channel-major (C, pixels); trimaps stacked along
    # rows, each padded with a 0.5 ring (0.5 thresholds to pos = neg = 0, i.e.
    # the zero-padded laplacian conv of the reference).
    x_cp = jnp.transpose(x, (1, 0, 2, 3)).reshape(c, p)
    tri_stack = jnp.pad(x[:, 3, :, :], ((0, 0), (1, 1), (1, 1)),
                        constant_values=0.5).reshape(n * (h + 2), w_ + 2)

    vmem = pl.BlockSpec(memory_space=pltpu.MemorySpace.VMEM)
    alpha_flat = pl.pallas_call(
        functools.partial(_fused_kernel, n=n, h=h, w=w_,
                          n_steps=N_STEPS, lr=LR),
        out_shape=jax.ShapeDtypeStruct((1, p), jnp.float32),
        in_specs=[vmem] * 7,
        out_specs=vmem,
        scratch_shapes=[pltpu.VMEM((1, p), jnp.float32)],   # dL/dalpha relayout
    )(x_cp, tri_stack,
      params["w_bb"].T, params["b_bb"].T, params["w_skip"].T,
      params["w_dec"].T, params["b_dec"])

    alpha = alpha_flat.reshape(n, h, w_)[:, None, :, :]      # back to NCHW
    return {"alpha": alpha}


def init_params(key):
    k1, k2, k3, k4 = jax.random.split(key, 4)
    return {
        "w_bb": 0.5 * jax.random.normal(k1, (C_IN, C_STAGE5), jnp.float32),
        "b_bb": 0.1 * jax.random.normal(k2, (1, C_STAGE5), jnp.float32),
        "w_skip": 0.5 * jax.random.normal(k3, (C_IN, C_STAGE5), jnp.float32),
        "w_dec": 0.5 * jax.random.normal(k4, (1, C_STAGE5), jnp.float32),
        "b_dec": jnp.full((1, 1), 0.2, jnp.float32),
    }


if __name__ == "__main__":
    key = jax.random.PRNGKey(0)
    kx, kt, kp = jax.random.split(key, 3)
    rgb = jax.random.normal(kx, (N, 3, H, W), jnp.float32)
    trimap = jax.random.uniform(kt, (N, 1, H, W), jnp.float32)   # trimap in [0, 1]
    x = jnp.concatenate([rgb, trimap], axis=1)                   # (N, 4, H, W) NCHW

    params = init_params(kp)
    out = jax.jit(test_time_model_forward)(x, params)
    alpha = jax.block_until_ready(out["alpha"])
    assert alpha.shape == (N, 1, H, W)
    assert bool(jnp.all(jnp.isfinite(alpha)))
    assert bool(jnp.all((alpha >= 0.0) & (alpha <= 1.0)))
    print("KERNEL_OK")
</pallas_src>

<mosaic_0001>
module attributes {stable_mosaic.version = 11 : i64} {
  func.func @_fused_kernel(%arg0: memref<4x512xf32, #tpu.memory_space<vmem>>, %arg1: memref<36x18xf32, #tpu.memory_space<vmem>>, %arg2: memref<8x4xf32, #tpu.memory_space<vmem>>, %arg3: memref<8x1xf32, #tpu.memory_space<vmem>>, %arg4: memref<8x4xf32, #tpu.memory_space<vmem>>, %arg5: memref<8x1xf32, #tpu.memory_space<vmem>>, %arg6: memref<1x1xf32, #tpu.memory_space<vmem>>, %arg7: memref<1x512xf32, #tpu.memory_space<vmem>>, %arg8: memref<1x512xf32, #tpu.memory_space<vmem>>) attributes {dimension_semantics = [], scalar_prefetch = 0 : i64, scratch_operands = 1 : i64, tpu.core_type = #tpu.core_type<tc>} {
    %c0 = arith.constant 0 : index
    %c0_0 = arith.constant 0 : index
    %0 = vector.load %arg1[%c0, %c0_0] : memref<36x18xf32, #tpu.memory_space<vmem>>, vector<36x18xf32>
    %cst = arith.constant 7.500000e-01 : f32
    %1 = vector.broadcast %cst : f32 to vector<36x18xf32>
    %2 = arith.cmpf ogt, %0, %1 : vector<36x18xf32>
    %3 = arith.extui %2 : vector<36x18xi1> to vector<36x18xi32>
    %4 = arith.sitofp %3 : vector<36x18xi32> to vector<36x18xf32>
    %cst_1 = arith.constant 2.500000e-01 : f32
    %5 = vector.broadcast %cst_1 : f32 to vector<36x18xf32>
    %6 = arith.cmpf olt, %0, %5 : vector<36x18xf32>
    %7 = arith.extui %6 : vector<36x18xi1> to vector<36x18xi32>
    %8 = arith.sitofp %7 : vector<36x18xi32> to vector<36x18xf32>
    %9 = vector.extract_strided_slice %4 {offsets = [0, 0], sizes = [36, 16], strides = [1, 1]} : vector<36x18xf32> to vector<36x16xf32>
    %10 = vector.extract_strided_slice %4 {offsets = [0, 1], sizes = [36, 16], strides = [1, 1]} : vector<36x18xf32> to vector<36x16xf32>
    %11 = arith.addf %9, %10 : vector<36x16xf32>
    %12 = vector.extract_strided_slice %4 {offsets = [0, 2], sizes = [36, 16], strides = [1, 1]} : vector<36x18xf32> to vector<36x16xf32>
    %13 = arith.addf %11, %12 : vector<36x16xf32>
    %14 = vector.extract_strided_slice %8 {offsets = [0, 0], sizes = [36, 16], strides = [1, 1]} : vector<36x18xf32> to vector<36x16xf32>
    %15 = vector.extract_strided_slice %8 {offsets = [0, 1], sizes = [36, 16], strides = [1, 1]} : vector<36x18xf32> to vector<36x16xf32>
    %16 = arith.addf %14, %15 : vector<36x16xf32>
    %17 = vector.extract_strided_slice %8 {offsets = [0, 2], sizes = [36, 16], strides = [1, 1]} : vector<36x18xf32> to vector<36x16xf32>
    %18 = arith.addf %16, %17 : vector<36x16xf32>
    %19 = vector.extract_strided_slice %13 {offsets = [0, 0], sizes = [34, 16], strides = [1, 1]} : vector<36x16xf32> to vector<34x16xf32>
    %20 = vector.extract_strided_slice %13 {offsets = [1, 0], sizes = [34, 16], strides = [1, 1]} : vector<36x16xf32> to vector<34x16xf32>
    %21 = arith.addf %19, %20 : vector<34x16xf32>
    %22 = vector.extract_strided_slice %13 {offsets = [2, 0], sizes = [34, 16], strides = [1, 1]} : vector<36x16xf32> to vector<34x16xf32>
    %23 = arith.addf %21, %22 : vector<34x16xf32>
    %24 = vector.extract_strided_slice %18 {offsets = [0, 0], sizes = [34, 16], strides = [1, 1]} : vector<36x16xf32> to vector<34x16xf32>
    %25 = vector.extract_strided_slice %18 {offsets = [1, 0], sizes = [34, 16], strides = [1, 1]} : vector<36x16xf32> to vector<34x16xf32>
    %26 = arith.addf %24, %25 : vector<34x16xf32>
    %27 = vector.extract_strided_slice %18 {offsets = [2, 0], sizes = [34, 16], strides = [1, 1]} : vector<36x16xf32> to vector<34x16xf32>
    %28 = arith.addf %26, %27 : vector<34x16xf32>
    %29 = vector.extract_strided_slice %4 {offsets = [1, 1], sizes = [16, 16], strides = [1, 1]} : vector<36x18xf32> to vector<16x16xf32>
    %30 = vector.extract_strided_slice %8 {offsets = [1, 1], sizes = [16, 16], strides = [1, 1]} : vector<36x18xf32> to vector<16x16xf32>
    %cst_2 = arith.constant 1.000000e+00 : f32
    %31 = vector.broadcast %cst_2 : f32 to vector<16x16xf32>
    %32 = arith.subf %31, %29 : vector<16x16xf32>
    %33 = arith.subf %32, %30 : vector<16x16xf32>
    %34 = vector.extract_strided_slice %23 {offsets = [0, 0], sizes = [16, 16], strides = [1, 1]} : vector<34x16xf32> to vector<16x16xf32>
    %cst_3 = arith.constant 9.000000e+00 : f32
    %35 = vector.broadcast %cst_3 : f32 to vector<16x16xf32>
    %36 = arith.mulf %35, %29 : vector<16x16xf32>
    %37 = arith.subf %34, %36 : vector<16x16xf32>
    %38 = math.absf %37 : vector<16x16xf32>
    %39 = arith.mulf %38, %33 : vector<16x16xf32>
    %40 = vector.extract_strided_slice %28 {offsets = [0, 0], sizes = [16, 16], strides = [1, 1]} : vector<34x16xf32> to vector<16x16xf32>
    %cst_4 = arith.constant 9.000000e+00 : f32
    %41 = vector.broadcast %cst_4 : f32 to vector<16x16xf32>
    %42 = arith.mulf %41, %30 : vector<16x16xf32>
    %43 = arith.subf %40, %42 : vector<16x16xf32>
    %44 = math.absf %43 : vector<16x16xf32>
    %45 = arith.mulf %44, %33 : vector<16x16xf32>
    %46 = vector.shape_cast %39 : vector<16x16xf32> to vector<1x16x16xf32>
    %cst_5 = arith.constant dense<0.000000e+00> : vector<1xf32>
    %47 = vector.multi_reduction <add>, %46, %cst_5 [1, 2] : vector<1x16x16xf32> to vector<1xf32>
    %48 = vector.shape_cast %47 : vector<1xf32> to vector<1x1x1xf32>
    %49 = vector.extract %48[0, 0, 0] : f32 from vector<1x1x1xf32>
    %cst_6 = arith.constant 0.000000e+00 : f32
    %50 = arith.addf %cst_6, %49 : f32
    %51 = vector.shape_cast %45 : vector<16x16xf32> to vector<1x16x16xf32>
    %cst_7 = arith.constant dense<0.000000e+00> : vector<1xf32>
    %52 = vector.multi_reduction <add>, %51, %cst_7 [1, 2] : vector<1x16x16xf32> to vector<1xf32>
    %53 = vector.shape_cast %52 : vector<1xf32> to vector<1x1x1xf32>
    %54 = vector.extract %53[0, 0, 0] : f32 from vector<1x1x1xf32>
    %cst_8 = arith.constant 0.000000e+00 : f32
    %55 = arith.addf %cst_8, %54 : f32
    %56 = vector.extract_strided_slice %4 {offsets = [19, 1], sizes = [16, 16], strides = [1, 1]} : vector<36x18xf32> to vector<16x16xf32>
    %57 = vector.extract_strided_slice %8 {offsets = [19, 1], sizes = [16, 16], strides = [1, 1]} : vector<36x18xf32> to vector<16x16xf32>
    %cst_9 = arith.constant 1.000000e+00 : f32
    %58 = vector.broadcast %cst_9 : f32 to vector<16x16xf32>
    %59 = arith.subf %58, %56 : vector<16x16xf32>
    %60 = arith.subf %59, %57 : vector<16x16xf32>
    %61 = vector.extract_strided_slice %23 {offsets = [18, 0], sizes = [16, 16], strides = [1, 1]} : vector<34x16xf32> to vector<16x16xf32>
    %cst_10 = arith.constant 9.000000e+00 : f32
    %62 = vector.broadcast %cst_10 : f32 to vector<16x16xf32>
    %63 = arith.mulf %62, %56 : vector<16x16xf32>
    %64 = arith.subf %61, %63 : vector<16x16xf32>
    %65 = math.absf %64 : vector<16x16xf32>
    %66 = arith.mulf %65, %60 : vector<16x16xf32>
    %67 = vector.extract_strided_slice %28 {offsets = [18, 0], sizes = [16, 16], strides = [1, 1]} : vector<34x16xf32> to vector<16x16xf32>
    %cst_11 = arith.constant 9.000000e+00 : f32
    %68 = vector.broadcast %cst_11 : f32 to vector<16x16xf32>
    %69 = arith.mulf %68, %57 : vector<16x16xf32>
    %70 = arith.subf %67, %69 : vector<16x16xf32>
    %71 = math.absf %70 : vector<16x16xf32>
    %72 = arith.mulf %71, %60 : vector<16x16xf32>
    %73 = vector.shape_cast %66 : vector<16x16xf32> to vector<1x16x16xf32>
    %cst_12 = arith.constant dense<0.000000e+00> : vector<1xf32>
    %74 = vector.multi_reduction <add>, %73, %cst_12 [1, 2] : vector<1x16x16xf32> to vector<1xf32>
    %75 = vector.shape_cast %74 : vector<1xf32> to vector<1x1x1xf32>
    %76 = vector.extract %75[0, 0, 0] : f32 from vector<1x1x1xf32>
    %77 = arith.addf %50, %76 : f32
    %78 = vector.shape_cast %72 : vector<16x16xf32> to vector<1x16x16xf32>
    %cst_13 = arith.constant dense<0.000000e+00> : vector<1xf32>
    %79 = vector.multi_reduction <add>, %78, %cst_13 [1, 2] : vector<1x16x16xf32> to vector<1xf32>
    %80 = vector.shape_cast %79 : vector<1xf32> to vector<1x1x1xf32>
    %81 = vector.extract %80[0, 0, 0] : f32 from vector<1x1x1xf32>
    %82 = arith.addf %55, %81 : f32
    %cst_14 = arith.constant 1.000000e-01 : f32
    %83 = arith.addf %77, %cst_14 : f32
    %cst_15 = arith.constant 1.000000e+00 : f32
    %84 = arith.divf %cst_15, %83 : f32
    %cst_16 = arith.constant 1.000000e-01 : f32
    %85 = arith.addf %82, %cst_16 : f32
    %cst_17 = arith.constant 1.000000e+00 : f32
    %86 = arith.divf %cst_17, %85 : f32
    %87 = vector.broadcast %86 : f32 to vector<16x16xf32>
    %88 = arith.mulf %45, %87 : vector<16x16xf32>
    %89 = vector.broadcast %84 : f32 to vector<16x16xf32>
    %90 = arith.mulf %39, %89 : vector<16x16xf32>
    %91 = arith.subf %88, %90 : vector<16x16xf32>
    %92 = vector.extract_strided_slice %91 {offsets = [0, 0], sizes = [1, 16], strides = [1, 1]} : vector<16x16xf32> to vector<1x16xf32>
    %c0_18 = arith.constant 0 : index
    %c0_19 = arith.constant 0 : index
    %93 = vector.load %arg8[%c0_18, %c0_19] : memref<1x512xf32, #tpu.memory_space<vmem>>, vector<1x16xf32>
    tpu.vector_store %arg8[%c0_18, %c0_19], %92 {strides = array<i32>} : memref<1x512xf32, #tpu.memory_space<vmem>>, vector<1x16xf32>,
    %94 = vector.extract_strided_slice %91 {offsets = [1, 0], sizes = [1, 16], strides = [1, 1]} : vector<16x16xf32> to vector<1x16xf32>
    %c0_20 = arith.constant 0 : index
    %c16 = arith.constant 16 : index
    %95 = vector.load %arg8[%c0_20, %c16] : memref<1x512xf32, #tpu.memory_space<vmem>>, vector<1x16xf32>
    tpu.vector_store %arg8[%c0_20, %c16], %94 {strides = array<i32>} : memref<1x512xf32, #tpu.memory_space<vmem>>, vector<1x16xf32>,
    %96 = vector.extract_strided_slice %91 {offsets = [2, 0], sizes = [1, 16], strides = [1, 1]} : vector<16x16xf32> to vector<1x16xf32>
    %c0_21 = arith.constant 0 : index
    %c32 = arith.constant 32 : index
    %97 = vector.load %arg8[%c0_21, %c32] : memref<1x512xf32, #tpu.memory_space<vmem>>, vector<1x16xf32>
    tpu.vector_store %arg8[%c0_21, %c32], %96 {strides = array<i32>} : memref<1x512xf32, #tpu.memory_space<vmem>>, vector<1x16xf32>,
    %98 = vector.extract_strided_slice %91 {offsets = [3, 0], sizes = [1, 16], strides = [1, 1]} : vector<16x16xf32> to vector<1x16xf32>
    %c0_22 = arith.constant 0 : index
    %c48 = arith.constant 48 : index
    %99 = vector.load %arg8[%c0_22, %c48] : memref<1x512xf32, #tpu.memory_space<vmem>>, vector<1x16xf32>
    tpu.vector_store %arg8[%c0_22, %c48], %98 {strides = array<i32>} : memref<1x512xf32, #tpu.memory_space<vmem>>, vector<1x16xf32>,
    %100 = vector.extract_strided_slice %91 {offsets = [4, 0], sizes = [1, 16], strides = [1, 1]} : vector<16x16xf32> to vector<1x16xf32>
    %c0_23 = arith.constant 0 : index
    %c64 = arith.constant 64 : index
    %101 = vector.load %arg8[%c0_23, %c64] : memref<1x512xf32, #tpu.memory_space<vmem>>, vector<1x16xf32>
    tpu.vector_store %arg8[%c0_23, %c64], %100 {strides = array<i32>} : memref<1x512xf32, #tpu.memory_space<vmem>>, vector<1x16xf32>,
    %102 = vector.extract_strided_slice %91 {offsets = [5, 0], sizes = [1, 16], strides = [1, 1]} : vector<16x16xf32> to vector<1x16xf32>
    %c0_24 = arith.constant 0 : index
    %c80 = arith.constant 80 : index
    %103 = vector.load %arg8[%c0_24, %c80] : memref<1x512xf32, #tpu.memory_space<vmem>>, vector<1x16xf32>
    tpu.vector_store %arg8[%c0_24, %c80], %102 {strides = array<i32>} : memref<1x512xf32, #tpu.memory_space<vmem>>, vector<1x16xf32>,
    %104 = vector.extract_strided_slice %91 {offsets = [6, 0], sizes = [1, 16], strides = [1, 1]} : vector<16x16xf32> to vector<1x16xf32>
    %c0_25 = arith.constant 0 : index
    %c96 = arith.constant 96 : index
    %105 = vector.load %arg8[%c0_25, %c96] : memref<1x512xf32, #tpu.memory_space<vmem>>, vector<1x16xf32>
    tpu.vector_store %arg8[%c0_25, %c96], %104 {strides = array<i32>} : memref<1x512xf32, #tpu.memory_space<vmem>>, vector<1x16xf32>,
    %106 = vector.extract_strided_slice %91 {offsets = [7, 0], sizes = [1, 16], strides = [1, 1]} : vector<16x16xf32> to vector<1x16xf32>
    %c0_26 = arith.constant 0 : index
    %c112 = arith.constant 112 : index
    %107 = vector.load %arg8[%c0_26, %c112] : memref<1x512xf32, #tpu.memory_space<vmem>>, vector<1x16xf32>
    tpu.vector_store %arg8[%c0_26, %c112], %106 {strides = array<i32>} : memref<1x512xf32, #tpu.memory_space<vmem>>, vector<1x16xf32>,
    %108 = vector.extract_strided_slice %91 {offsets = [8, 0], sizes = [1, 16], strides = [1, 1]} : vector<16x16xf32> to vector<1x16xf32>
    %c0_27 = arith.constant 0 : index
    %c128 = arith.constant 128 : index
    %109 = vector.load %arg8[%c0_27, %c128] : memref<1x512xf32, #tpu.memory_space<vmem>>, vector<1x16xf32>
    tpu.vector_store %arg8[%c0_27, %c128], %108 {strides = array<i32>} : memref<1x512xf32, #tpu.memory_space<vmem>>, vector<1x16xf32>,
    %110 = vector.extract_strided_slice %91 {offsets = [9, 0], sizes = [1, 16], strides = [1, 1]} : vector<16x16xf32> to vector<1x16xf32>
    %c0_28 = arith.constant 0 : index
    %c144 = arith.constant 144 : index
    %111 = vector.load %arg8[%c0_28, %c144] : memref<1x512xf32, #tpu.memory_space<vmem>>, vector<1x16xf32>
    tpu.vector_store %arg8[%c0_28, %c144], %110 {strides = array<i32>} : memref<1x512xf32, #tpu.memory_space<vmem>>, vector<1x16xf32>,
    %112 = vector.extract_strided_slice %91 {offsets = [10, 0], sizes = [1, 16], strides = [1, 1]} : vector<16x16xf32> to vector<1x16xf32>
    %c0_29 = arith.constant 0 : index
    %c160 = arith.constant 160 : index
    %113 = vector.load %arg8[%c0_29, %c160] : memref<1x512xf32, #tpu.memory_space<vmem>>, vector<1x16xf32>
    tpu.vector_store %arg8[%c0_29, %c160], %112 {strides = array<i32>} : memref<1x512xf32, #tpu.memory_space<vmem>>, vector<1x16xf32>,
    %114 = vector.extract_strided_slice %91 {offsets = [11, 0], sizes = [1, 16], strides = [1, 1]} : vector<16x16xf32> to vector<1x16xf32>
    %c0_30 = arith.constant 0 : index
    %c176 = arith.constant 176 : index
    %115 = vector.load %arg8[%c0_30, %c176] : memref<1x512xf32, #tpu.memory_space<vmem>>, vector<1x16xf32>
    tpu.vector_store %arg8[%c0_30, %c176], %114 {strides = array<i32>} : memref<1x512xf32, #tpu.memory_space<vmem>>, vector<1x16xf32>,
    %116 = vector.extract_strided_slice %91 {offsets = [12, 0], sizes = [1, 16], strides = [1, 1]} : vector<16x16xf32> to vector<1x16xf32>
    %c0_31 = arith.constant 0 : index
    %c192 = arith.constant 192 : index
    %117 = vector.load %arg8[%c0_31, %c192] : memref<1x512xf32, #tpu.memory_space<vmem>>, vector<1x16xf32>
    tpu.vector_store %arg8[%c0_31, %c192], %116 {strides = array<i32>} : memref<1x512xf32, #tpu.memory_space<vmem>>, vector<1x16xf32>,
    %118 = vector.extract_strided_slice %91 {offsets = [13, 0], sizes = [1, 16], strides = [1, 1]} : vector<16x16xf32> to vector<1x16xf32>
    %c0_32 = arith.constant 0 : index
    %c208 = arith.constant 208 : index
    %119 = vector.load %arg8[%c0_32, %c208] : memref<1x512xf32, #tpu.memory_space<vmem>>, vector<1x16xf32>
    tpu.vector_store %arg8[%c0_32, %c208], %118 {strides = array<i32>} : memref<1x512xf32, #tpu.memory_space<vmem>>, vector<1x16xf32>,
    %120 = vector.extract_strided_slice %91 {offsets = [14, 0], sizes = [1, 16], strides = [1, 1]} : vector<16x16xf32> to vector<1x16xf32>
    %c0_33 = arith.constant 0 : index
    %c224 = arith.constant 224 : index
    %121 = vector.load %arg8[%c0_33, %c224] : memref<1x512xf32, #tpu.memory_space<vmem>>, vector<1x16xf32>
    tpu.vector_store %arg8[%c0_33, %c224], %120 {strides = array<i32>} : memref<1x512xf32, #tpu.memory_space<vmem>>, vector<1x16xf32>,
    %122 = vector.extract_strided_slice %91 {offsets = [15, 0], sizes = [1, 16], strides = [1, 1]} : vector<16x16xf32> to vector<1x16xf32>
    %c0_34 = arith.constant 0 : index
    %c240 = arith.constant 240 : index
    %123 = vector.load %arg8[%c0_34, %c240] : memref<1x512xf32, #tpu.memory_space<vmem>>, vector<1x16xf32>
    tpu.vector_store %arg8[%c0_34, %c240], %122 {strides = array<i32>} : memref<1x512xf32, #tpu.memory_space<vmem>>, vector<1x16xf32>,
    %124 = vector.broadcast %86 : f32 to vector<16x16xf32>
    %125 = arith.mulf %72, %124 : vector<16x16xf32>
    %126 = vector.broadcast %84 : f32 to vector<16x16xf32>
    %127 = arith.mulf %66, %126 : vector<16x16xf32>
    %128 = arith.subf %125, %127 : vector<16x16xf32>
    %129 = vector.extract_strided_slice %128 {offsets = [0, 0], sizes = [1, 16], strides = [1, 1]} : vector<16x16xf32> to vector<1x16xf32>
    %c0_35 = arith.constant 0 : index
    %c256 = arith.constant 256 : index
    %130 = vector.load %arg8[%c0_35, %c256] : memref<1x512xf32, #tpu.memory_space<vmem>>, vector<1x16xf32>
    tpu.vector_store %arg8[%c0_35, %c256], %129 {strides = array<i32>} : memref<1x512xf32, #tpu.memory_space<vmem>>, vector<1x16xf32>,
    %131 = vector.extract_strided_slice %128 {offsets = [1, 0], sizes = [1, 16], strides = [1, 1]} : vector<16x16xf32> to vector<1x16xf32>
    %c0_36 = arith.constant 0 : index
    %c272 = arith.constant 272 : index
    %132 = vector.load %arg8[%c0_36, %c272] : memref<1x512xf32, #tpu.memory_space<vmem>>, vector<1x16xf32>
    tpu.vector_store %arg8[%c0_36, %c272], %131 {strides = array<i32>} : memref<1x512xf32, #tpu.memory_space<vmem>>, vector<1x16xf32>,
    %133 = vector.extract_strided_slice %128 {offsets = [2, 0], sizes = [1, 16], strides = [1, 1]} : vector<16x16xf32> to vector<1x16xf32>
    %c0_37 = arith.constant 0 : index
    %c288 = arith.constant 288 : index
    %134 = vector.load %arg8[%c0_37, %c288] : memref<1x512xf32, #tpu.memory_space<vmem>>, vector<1x16xf32>
    tpu.vector_store %arg8[%c0_37, %c288], %133 {strides = array<i32>} : memref<1x512xf32, #tpu.memory_space<vmem>>, vector<1x16xf32>,
    %135 = vector.extract_strided_slice %128 {offsets = [3, 0], sizes = [1, 16], strides = [1, 1]} : vector<16x16xf32> to vector<1x16xf32>
    %c0_38 = arith.constant 0 : index
    %c304 = arith.constant 304 : index
    %136 = vector.load %arg8[%c0_38, %c304] : memref<1x512xf32, #tpu.memory_space<vmem>>, vector<1x16xf32>
    tpu.vector_store %arg8[%c0_38, %c304], %135 {strides = array<i32>} : memref<1x512xf32, #tpu.memory_space<vmem>>, vector<1x16xf32>,
    %137 = vector.extract_strided_slice %128 {offsets = [4, 0], sizes = [1, 16], strides = [1, 1]} : vector<16x16xf32> to vector<1x16xf32>
    %c0_39 = arith.constant 0 : index
    %c320 = arith.constant 320 : index
    %138 = vector.load %arg8[%c0_39, %c320] : memref<1x512xf32, #tpu.memory_space<vmem>>, vector<1x16xf32>
    tpu.vector_store %arg8[%c0_39, %c320], %137 {strides = array<i32>} : memref<1x512xf32, #tpu.memory_space<vmem>>, vector<1x16xf32>,
    %139 = vector.extract_strided_slice %128 {offsets = [5, 0], sizes = [1, 16], strides = [1, 1]} : vector<16x16xf32> to vector<1x16xf32>
    %c0_40 = arith.constant 0 : index
    %c336 = arith.constant 336 : index
    %140 = vector.load %arg8[%c0_40, %c336] : memref<1x512xf32, #tpu.memory_space<vmem>>, vector<1x16xf32>
    tpu.vector_store %arg8[%c0_40, %c336], %139 {strides = array<i32>} : memref<1x512xf32, #tpu.memory_space<vmem>>, vector<1x16xf32>,
    %141 = vector.extract_strided_slice %128 {offsets = [6, 0], sizes = [1, 16], strides = [1, 1]} : vector<16x16xf32> to vector<1x16xf32>
    %c0_41 = arith.constant 0 : index
    %c352 = arith.constant 352 : index
    %142 = vector.load %arg8[%c0_41, %c352] : memref<1x512xf32, #tpu.memory_space<vmem>>, vector<1x16xf32>
    tpu.vector_store %arg8[%c0_41, %c352], %141 {strides = array<i32>} : memref<1x512xf32, #tpu.memory_space<vmem>>, vector<1x16xf32>,
    %143 = vector.extract_strided_slice %128 {offsets = [7, 0], sizes = [1, 16], strides = [1, 1]} : vector<16x16xf32> to vector<1x16xf32>
    %c0_42 = arith.constant 0 : index
    %c368 = arith.constant 368 : index
    %144 = vector.load %arg8[%c0_42, %c368] : memref<1x512xf32, #tpu.memory_space<vmem>>, vector<1x16xf32>
    tpu.vector_store %arg8[%c0_42, %c368], %143 {strides = array<i32>} : memref<1x512xf32, #tpu.memory_space<vmem>>, vector<1x16xf32>,
    %145 = vector.extract_strided_slice %128 {offsets = [8, 0], sizes = [1, 16], strides = [1, 1]} : vector<16x16xf32> to vector<1x16xf32>
    %c0_43 = arith.constant 0 : index
    %c384 = arith.constant 384 : index
    %146 = vector.load %arg8[%c0_43, %c384] : memref<1x512xf32, #tpu.memory_space<vmem>>, vector<1x16xf32>
    tpu.vector_store %arg8[%c0_43, %c384], %145 {strides = array<i32>} : memref<1x512xf32, #tpu.memory_space<vmem>>, vector<1x16xf32>,
    %147 = vector.extract_strided_slice %128 {offsets = [9, 0], sizes = [1, 16], strides = [1, 1]} : vector<16x16xf32> to vector<1x16xf32>
    %c0_44 = arith.constant 0 : index
    %c400 = arith.constant 400 : index
    %148 = vector.load %arg8[%c0_44, %c400] : memref<1x512xf32, #tpu.memory_space<vmem>>, vector<1x16xf32>
    tpu.vector_store %arg8[%c0_44, %c400], %147 {strides = array<i32>} : memref<1x512xf32, #tpu.memory_space<vmem>>, vector<1x16xf32>,
    %149 = vector.extract_strided_slice %128 {offsets = [10, 0], sizes = [1, 16], strides = [1, 1]} : vector<16x16xf32> to vector<1x16xf32>
    %c0_45 = arith.constant 0 : index
    %c416 = arith.constant 416 : index
    %150 = vector.load %arg8[%c0_45, %c416] : memref<1x512xf32, #tpu.memory_space<vmem>>, vector<1x16xf32>
    tpu.vector_store %arg8[%c0_45, %c416], %149 {strides = array<i32>} : memref<1x512xf32, #tpu.memory_space<vmem>>, vector<1x16xf32>,
    %151 = vector.extract_strided_slice %128 {offsets = [11, 0], sizes = [1, 16], strides = [1, 1]} : vector<16x16xf32> to vector<1x16xf32>
    %c0_46 = arith.constant 0 : index
    %c432 = arith.constant 432 : index
    %152 = vector.load %arg8[%c0_46, %c432] : memref<1x512xf32, #tpu.memory_space<vmem>>, vector<1x16xf32>
    tpu.vector_store %arg8[%c0_46, %c432], %151 {strides = array<i32>} : memref<1x512xf32, #tpu.memory_space<vmem>>, vector<1x16xf32>,
    %153 = vector.extract_strided_slice %128 {offsets = [12, 0], sizes = [1, 16], strides = [1, 1]} : vector<16x16xf32> to vector<1x16xf32>
    %c0_47 = arith.constant 0 : index
    %c448 = arith.constant 448 : index
    %154 = vector.load %arg8[%c0_47, %c448] : memref<1x512xf32, #tpu.memory_space<vmem>>, vector<1x16xf32>
    tpu.vector_store %arg8[%c0_47, %c448], %153 {strides = array<i32>} : memref<1x512xf32, #tpu.memory_space<vmem>>, vector<1x16xf32>,
    %155 = vector.extract_strided_slice %128 {offsets = [13, 0], sizes = [1, 16], strides = [1, 1]} : vector<16x16xf32> to vector<1x16xf32>
    %c0_48 = arith.constant 0 : index
    %c464 = arith.constant 464 : index
    %156 = vector.load %arg8[%c0_48, %c464] : memref<1x512xf32, #tpu.memory_space<vmem>>, vector<1x16xf32>
    tpu.vector_store %arg8[%c0_48, %c464], %155 {strides = array<i32>} : memref<1x512xf32, #tpu.memory_space<vmem>>, vector<1x16xf32>,
    %157 = vector.extract_strided_slice %128 {offsets = [14, 0], sizes = [1, 16], strides = [1, 1]} : vector<16x16xf32> to vector<1x16xf32>
    %c0_49 = arith.constant 0 : index
    %c480 = arith.constant 480 : index
    %158 = vector.load %arg8[%c0_49, %c480] : memref<1x512xf32, #tpu.memory_space<vmem>>, vector<1x16xf32>
    tpu.vector_store %arg8[%c0_49, %c480], %157 {strides = array<i32>} : memref<1x512xf32, #tpu.memory_space<vmem>>, vector<1x16xf32>,
    %159 = vector.extract_strided_slice %128 {offsets = [15, 0], sizes = [1, 16], strides = [1, 1]} : vector<16x16xf32> to vector<1x16xf32>
    %c0_50 = arith.constant 0 : index
    %c496 = arith.constant 496 : index
    %160 = vector.load %arg8[%c0_50, %c496] : memref<1x512xf32, #tpu.memory_space<vmem>>, vector<1x16xf32>
    tpu.vector_store %arg8[%c0_50, %c496], %159 {strides = array<i32>} : memref<1x512xf32, #tpu.memory_space<vmem>>, vector<1x16xf32>,
    %c0_51 = arith.constant 0 : index
    %c0_52 = arith.constant 0 : index
    %161 = vector.load %arg8[%c0_51, %c0_52] : memref<1x512xf32, #tpu.memory_space<vmem>>, vector<1x512xf32>
    %c0_53 = arith.constant 0 : index
    %c0_54 = arith.constant 0 : index
    %162 = vector.load %arg0[%c0_53, %c0_54] : memref<4x512xf32, #tpu.memory_space<vmem>>, vector<4x512xf32>
    %c0_55 = arith.constant 0 : index
    %c0_56 = arith.constant 0 : index
    %163 = vector.load %arg2[%c0_55, %c0_56] : memref<8x4xf32, #tpu.memory_space<vmem>>, vector<8x4xf32>
    %c0_57 = arith.constant 0 : index
    %c0_58 = arith.constant 0 : index
    %164 = vector.load %arg4[%c0_57, %c0_58] : memref<8x4xf32, #tpu.memory_space<vmem>>, vector<8x4xf32>
    %165 = vector.extract_strided_slice %162 {offsets = [0, 0], sizes = [1, 512], strides = [1, 1]} : vector<4x512xf32> to vector<1x512xf32>
    %166 = vector.extract_strided_slice %163 {offsets = [0, 0], sizes = [8, 1], strides = [1, 1]} : vector<8x4xf32> to vector<8x1xf32>
    %167 = vector.broadcast %165 : vector<1x512xf32> to vector<8x512xf32>
    %168 = vector.broadcast %166 : vector<8x1xf32> to vector<8x512xf32>
    %169 = arith.mulf %167, %168 : vector<8x512xf32>
    %170 = vector.extract_strided_slice %162 {offsets = [0, 0], sizes = [1, 512], strides = [1, 1]} : vector<4x512xf32> to vector<1x512xf32>
    %171 = vector.extract_strided_slice %164 {offsets = [0, 0], sizes = [8, 1], strides = [1, 1]} : vector<8x4xf32> to vector<8x1xf32>
    %172 = vector.broadcast %170 : vector<1x512xf32> to vector<8x512xf32>
    %173 = vector.broadcast %171 : vector<8x1xf32> to vector<8x512xf32>
    %174 = arith.mulf %172, %173 : vector<8x512xf32>
    %175 = vector.extract_strided_slice %162 {offsets = [1, 0], sizes = [1, 512], strides = [1, 1]} : vector<4x512xf32> to vector<1x512xf32>
    %176 = vector.extract_strided_slice %163 {offsets = [0, 1], sizes = [8, 1], strides = [1, 1]} : vector<8x4xf32> to vector<8x1xf32>
    %177 = vector.broadcast %175 : vector<1x512xf32> to vector<8x512xf32>
    %178 = vector.broadcast %176 : vector<8x1xf32> to vector<8x512xf32>
    %179 = arith.mulf %177, %178 : vector<8x512xf32>
    %180 = arith.addf %169, %179 : vector<8x512xf32>
    %181 = vector.extract_strided_slice %162 {offsets = [1, 0], sizes = [1, 512], strides = [1, 1]} : vector<4x512xf32> to vector<1x512xf32>
    %182 = vector.extract_strided_slice %164 {offsets = [0, 1], sizes = [8, 1], strides = [1, 1]} : vector<8x4xf32> to vector<8x1xf32>
    %183 = vector.broadcast %181 : vector<1x512xf32> to vector<8x512xf32>
    %184 = vector.broadcast %182 : vector<8x1xf32> to vector<8x512xf32>
    %185 = arith.mulf %183, %184 : vector<8x512xf32>
    %186 = arith.addf %174, %185 : vector<8x512xf32>
    %187 = vector.extract_strided_slice %162 {offsets = [2, 0], sizes = [1, 512], strides = [1, 1]} : vector<4x512xf32> to vector<1x512xf32>
    %188 = vector.extract_strided_slice %163 {offsets = [0, 2], sizes = [8, 1], strides = [1, 1]} : vector<8x4xf32> to vector<8x1xf32>
    %189 = vector.broadcast %187 : vector<1x512xf32> to vector<8x512xf32>
    %190 = vector.broadcast %188 : vector<8x1xf32> to vector<8x512xf32>
    %191 = arith.mulf %189, %190 : vector<8x512xf32>
    %192 = arith.addf %180, %191 : vector<8x512xf32>
    %193 = vector.extract_strided_slice %162 {offsets = [2, 0], sizes = [1, 512], strides = [1, 1]} : vector<4x512xf32> to vector<1x512xf32>
    %194 = vector.extract_strided_slice %164 {offsets = [0, 2], sizes = [8, 1], strides = [1, 1]} : vector<8x4xf32> to vector<8x1xf32>
    %195 = vector.broadcast %193 : vector<1x512xf32> to vector<8x512xf32>
    %196 = vector.broadcast %194 : vector<8x1xf32> to vector<8x512xf32>
    %197 = arith.mulf %195, %196 : vector<8x512xf32>
    %198 = arith.addf %186, %197 : vector<8x512xf32>
    %199 = vector.extract_strided_slice %162 {offsets = [3, 0], sizes = [1, 512], strides = [1, 1]} : vector<4x512xf32> to vector<1x512xf32>
    %200 = vector.extract_strided_slice %163 {offsets = [0, 3], sizes = [8, 1], strides = [1, 1]} : vector<8x4xf32> to vector<8x1xf32>
    %201 = vector.broadcast %199 : vector<1x512xf32> to vector<8x512xf32>
    %202 = vector.broadcast %200 : vector<8x1xf32> to vector<8x512xf32>
    %203 = arith.mulf %201, %202 : vector<8x512xf32>
    %204 = arith.addf %192, %203 : vector<8x512xf32>
    %205 = vector.extract_strided_slice %162 {offsets = [3, 0], sizes = [1, 512], strides = [1, 1]} : vector<4x512xf32> to vector<1x512xf32>
    %206 = vector.extract_strided_slice %164 {offsets = [0, 3], sizes = [8, 1], strides = [1, 1]} : vector<8x4xf32> to vector<8x1xf32>
    %207 = vector.broadcast %205 : vector<1x512xf32> to vector<8x512xf32>
    %208 = vector.broadcast %206 : vector<8x1xf32> to vector<8x512xf32>
    %209 = arith.mulf %207, %208 : vector<8x512xf32>
    %210 = arith.addf %198, %209 : vector<8x512xf32>
    %c0_59 = arith.constant 0 : index
    %c0_60 = arith.constant 0 : index
    %211 = vector.load %arg3[%c0_59, %c0_60] : memref<8x1xf32, #tpu.memory_space<vmem>>, vector<8x1xf32>
    %212 = vector.broadcast %211 : vector<8x1xf32> to vector<8x512xf32>
    %213 = arith.addf %204, %212 : vector<8x512xf32>
    %cst_61 = arith.constant 0.000000e+00 : f32
    %214 = vector.broadcast %cst_61 : f32 to vector<8x512xf32>
    %215 = arith.maximumf %213, %214 : vector<8x512xf32>
    %216 = arith.addf %215, %210 : vector<8x512xf32>
    %c0_62 = arith.constant 0 : index
    %c0_63 = arith.constant 0 : index
    %217 = vector.load %arg5[%c0_62, %c0_63] : memref<8x1xf32, #tpu.memory_space<vmem>>, vector<8x1xf32>
    %218 = vector.broadcast %217 : vector<8x1xf32> to vector<8x512xf32>
    %219 = arith.mulf %216, %218 : vector<8x512xf32>
    %220 = arith.mulf %217, %217 : vector<8x1xf32>
    %221 = vector.shape_cast %220 : vector<8x1xf32> to vector<1x8x1xf32>
    %cst_64 = arith.constant dense<0.000000e+00> : vector<1xf32>
    %222 = vector.multi_reduction <add>, %221, %cst_64 [1, 2] : vector<1x8x1xf32> to vector<1xf32>
    %223 = vector.shape_cast %222 : vector<1xf32> to vector<1x1x1xf32>
    %224 = vector.extract %223[0, 0, 0] : f32 from vector<1x1x1xf32>
    %cst_65 = arith.constant 0.000000e+00 : f32
    %225 = vector.broadcast %cst_65 : f32 to vector<8x1xf32>
    %c0_66 = arith.constant 0 : index
    %c0_67 = arith.constant 0 : index
    %226 = vector.load %arg6[%c0_66, %c0_67] : memref<1x1xf32, #tpu.memory_space<vmem>>, vector<1x1xf32>
    %227 = arith.negf %225 : vector<8x1xf32>
    %228 = math.exp %227 : vector<8x1xf32>
    %cst_68 = arith.constant 1.000000e+00 : f32
    %229 = vector.broadcast %cst_68 : f32 to vector<8x1xf32>
    %230 = arith.addf %229, %228 : vector<8x1xf32>
    %231 = arith.divf %229, %230 : vector<8x1xf32>
    %cst_69 = arith.constant 2.000000e+00 : f32
    %232 = vector.broadcast %cst_69 : f32 to vector<8x1xf32>
    %233 = arith.mulf %232, %231 : vector<8x1xf32>
    %234 = vector.broadcast %233 : vector<8x1xf32> to vector<8x512xf32>
    %235 = arith.mulf %219, %234 : vector<8x512xf32>
    %cst_70 = arith.constant dense<0.000000e+00> : vector<512xf32>
    %236 = vector.multi_reduction <add>, %235, %cst_70 [0] : vector<8x512xf32> to vector<512xf32>
    %237 = vector.shape_cast %236 : vector<512xf32> to vector<1x512xf32>
    %238 = vector.broadcast %226 : vector<1x1xf32> to vector<1x512xf32>
    %239 = arith.addf %237, %238 : vector<1x512xf32>
    %cst_71 = arith.constant 0.000000e+00 : f32
    %240 = vector.broadcast %cst_71 : f32 to vector<1x512xf32>
    %241 = arith.cmpf oge, %239, %240 : vector<1x512xf32>
    %cst_72 = arith.constant 1.000000e+00 : f32
    %242 = vector.broadcast %cst_72 : f32 to vector<1x512xf32>
    %243 = arith.cmpf ole, %239, %242 : vector<1x512xf32>
    %244 = arith.andi %241, %243 : vector<1x512xi1>
    %cst_73 = arith.constant 0.000000e+00 : f32
    %245 = vector.broadcast %cst_73 : f32 to vector<1x512xf32>
    %246 = arith.select %244, %161, %245 : vector<1x512xi1>, vector<1x512xf32>
    %247 = vector.broadcast %246 : vector<1x512xf32> to vector<8x512xf32>
    %248 = arith.mulf %219, %247 : vector<8x512xf32>
    %cst_74 = arith.constant dense<0.000000e+00> : vector<8xf32>
    %249 = vector.multi_reduction <add>, %248, %cst_74 [1] : vector<8x512xf32> to vector<8xf32>
    %250 = vector.shape_cast %249 : vector<8xf32> to vector<8x1xf32>
    %cst_75 = arith.constant 1.000000e+00 : f32
    %251 = vector.broadcast %cst_75 : f32 to vector<8x1xf32>
    %252 = arith.subf %251, %231 : vector<8x1xf32>
    %253 = arith.mulf %233, %252 : vector<8x1xf32>
    %254 = arith.mulf %250, %253 : vector<8x1xf32>
    %cst_76 = arith.constant 1.000000e-01 : f32
    %255 = vector.broadcast %cst_76 : f32 to vector<8x1xf32>
    %256 = arith.mulf %255, %254 : vector<8x1xf32>
    %257 = arith.subf %225, %256 : vector<8x1xf32>
    %258 = vector.shape_cast %246 : vector<1x512xf32> to vector<1x1x512xf32>
    %cst_77 = arith.constant dense<0.000000e+00> : vector<1xf32>
    %259 = vector.multi_reduction <add>, %258, %cst_77 [1, 2] : vector<1x1x512xf32> to vector<1xf32>
    %260 = vector.shape_cast %259 : vector<1xf32> to vector<1x1x1xf32>
    %261 = vector.extract %260[0, 0, 0] : f32 from vector<1x1x1xf32>
    %262 = arith.mulf %261, %224 : f32
    %cst_78 = arith.constant 1.000000e-01 : f32
    %263 = arith.mulf %cst_78, %262 : f32
    %264 = vector.broadcast %263 : f32 to vector<1x1xf32>
    %265 = arith.subf %226, %264 : vector<1x1xf32>
    %266 = arith.negf %257 : vector<8x1xf32>
    %267 = math.exp %266 : vector<8x1xf32>
    %cst_79 = arith.constant 1.000000e+00 : f32
    %268 = vector.broadcast %cst_79 : f32 to vector<8x1xf32>
    %269 = arith.addf %268, %267 : vector<8x1xf32>
    %270 = arith.divf %268, %269 : vector<8x1xf32>
    %cst_80 = arith.constant 2.000000e+00 : f32
    %271 = vector.broadcast %cst_80 : f32 to vector<8x1xf32>
    %272 = arith.mulf %271, %270 : vector<8x1xf32>
    %273 = vector.broadcast %272 : vector<8x1xf32> to vector<8x512xf32>
    %274 = arith.mulf %219, %273 : vector<8x512xf32>
    %cst_81 = arith.constant dense<0.000000e+00> : vector<512xf32>
    %275 = vector.multi_reduction <add>, %274, %cst_81 [0] : vector<8x512xf32> to vector<512xf32>
    %276 = vector.shape_cast %275 : vector<512xf32> to vector<1x512xf32>
    %277 = vector.broadcast %265 : vector<1x1xf32> to vector<1x512xf32>
    %278 = arith.addf %276, %277 : vector<1x512xf32>
    %cst_82 = arith.constant 0.000000e+00 : f32
    %279 = vector.broadcast %cst_82 : f32 to vector<1x512xf32>
    %280 = arith.cmpf oge, %278, %279 : vector<1x512xf32>
    %cst_83 = arith.constant 1.000000e+00 : f32
    %281 = vector.broadcast %cst_83 : f32 to vector<1x512xf32>
    %282 = arith.cmpf ole, %278, %281 : vector<1x512xf32>
    %283 = arith.andi %280, %282 : vector<1x512xi1>
    %cst_84 = arith.constant 0.000000e+00 : f32
    %284 = vector.broadcast %cst_84 : f32 to vector<1x512xf32>
    %285 = arith.select %283, %161, %284 : vector<1x512xi1>, vector<1x512xf32>
    %286 = vector.broadcast %285 : vector<1x512xf32> to vector<8x512xf32>
    %287 = arith.mulf %219, %286 : vector<8x512xf32>
    %cst_85 = arith.constant dense<0.000000e+00> : vector<8xf32>
    %288 = vector.multi_reduction <add>, %287, %cst_85 [1] : vector<8x512xf32> to vector<8xf32>
    %289 = vector.shape_cast %288 : vector<8xf32> to vector<8x1xf32>
    %cst_86 = arith.constant 1.000000e+00 : f32
    %290 = vector.broadcast %cst_86 : f32 to vector<8x1xf32>
    %291 = arith.subf %290, %270 : vector<8x1xf32>
    %292 = arith.mulf %272, %291 : vector<8x1xf32>
    %293 = arith.mulf %289, %292 : vector<8x1xf32>
    %cst_87 = arith.constant 1.000000e-01 : f32
    %294 = vector.broadcast %cst_87 : f32 to vector<8x1xf32>
    %295 = arith.mulf %294, %293 : vector<8x1xf32>
    %296 = arith.subf %257, %295 : vector<8x1xf32>
    %297 = vector.shape_cast %285 : vector<1x512xf32> to vector<1x1x512xf32>
    %cst_88 = arith.constant dense<0.000000e+00> : vector<1xf32>
    %298 = vector.multi_reduction <add>, %297, %cst_88 [1, 2] : vector<1x1x512xf32> to vector<1xf32>
    %299 = vector.shape_cast %298 : vector<1xf32> to vector<1x1x1xf32>
    %300 = vector.extract %299[0, 0, 0] : f32 from vector<1x1x1xf32>
    %301 = arith.mulf %300, %224 : f32
    %cst_89 = arith.constant 1.000000e-01 : f32
    %302 = arith.mulf %cst_89, %301 : f32
    %303 = vector.broadcast %302 : f32 to vector<1x1xf32>
    %304 = arith.subf %265, %303 : vector<1x1xf32>
    %305 = arith.negf %296 : vector<8x1xf32>
    %306 = math.exp %305 : vector<8x1xf32>
    %cst_90 = arith.constant 1.000000e+00 : f32
    %307 = vector.broadcast %cst_90 : f32 to vector<8x1xf32>
    %308 = arith.addf %307, %306 : vector<8x1xf32>
    %309 = arith.divf %307, %308 : vector<8x1xf32>
    %cst_91 = arith.constant 2.000000e+00 : f32
    %310 = vector.broadcast %cst_91 : f32 to vector<8x1xf32>
    %311 = arith.mulf %310, %309 : vector<8x1xf32>
    %312 = vector.broadcast %311 : vector<8x1xf32> to vector<8x512xf32>
    %313 = arith.mulf %219, %312 : vector<8x512xf32>
    %cst_92 = arith.constant dense<0.000000e+00> : vector<512xf32>
    %314 = vector.multi_reduction <add>, %313, %cst_92 [0] : vector<8x512xf32> to vector<512xf32>
    %315 = vector.shape_cast %314 : vector<512xf32> to vector<1x512xf32>
    %316 = vector.broadcast %304 : vector<1x1xf32> to vector<1x512xf32>
    %317 = arith.addf %315, %316 : vector<1x512xf32>
    %cst_93 = arith.constant 0.000000e+00 : f32
    %318 = vector.broadcast %cst_93 : f32 to vector<1x512xf32>
    %319 = arith.cmpf oge, %317, %318 : vector<1x512xf32>
    %cst_94 = arith.constant 1.000000e+00 : f32
    %320 = vector.broadcast %cst_94 : f32 to vector<1x512xf32>
    %321 = arith.cmpf ole, %317, %320 : vector<1x512xf32>
    %322 = arith.andi %319, %321 : vector<1x512xi1>
    %cst_95 = arith.constant 0.000000e+00 : f32
    %323 = vector.broadcast %cst_95 : f32 to vector<1x512xf32>
    %324 = arith.select %322, %161, %323 : vector<1x512xi1>, vector<1x512xf32>
    %325 = vector.broadcast %324 : vector<1x512xf32> to vector<8x512xf32>
    %326 = arith.mulf %219, %325 : vector<8x512xf32>
    %cst_96 = arith.constant dense<0.000000e+00> : vector<8xf32>
    %327 = vector.multi_reduction <add>, %326, %cst_96 [1] : vector<8x512xf32> to vector<8xf32>
    %328 = vector.shape_cast %327 : vector<8xf32> to vector<8x1xf32>
    %cst_97 = arith.constant 1.000000e+00 : f32
    %329 = vector.broadcast %cst_97 : f32 to vector<8x1xf32>
    %330 = arith.subf %329, %309 : vector<8x1xf32>
    %331 = arith.mulf %311, %330 : vector<8x1xf32>
    %332 = arith.mulf %328, %331 : vector<8x1xf32>
    %cst_98 = arith.constant 1.000000e-01 : f32
    %333 = vector.broadcast %cst_98 : f32 to vector<8x1xf32>
    %334 = arith.mulf %333, %332 : vector<8x1xf32>
    %335 = arith.subf %296, %334 : vector<8x1xf32>
    %336 = vector.shape_cast %324 : vector<1x512xf32> to vector<1x1x512xf32>
    %cst_99 = arith.constant dense<0.000000e+00> : vector<1xf32>
    %337 = vector.multi_reduction <add>, %336, %cst_99 [1, 2] : vector<1x1x512xf32> to vector<1xf32>
    %338 = vector.shape_cast %337 : vector<1xf32> to vector<1x1x1xf32>
    %339 = vector.extract %338[0, 0, 0] : f32 from vector<1x1x1xf32>
    %340 = arith.mulf %339, %224 : f32
    %cst_100 = arith.constant 1.000000e-01 : f32
    %341 = arith.mulf %cst_100, %340 : f32
    %342 = vector.broadcast %341 : f32 to vector<1x1xf32>
    %343 = arith.subf %304, %342 : vector<1x1xf32>
    %344 = arith.negf %335 : vector<8x1xf32>
    %345 = math.exp %344 : vector<8x1xf32>
    %cst_101 = arith.constant 1.000000e+00 : f32
    %346 = vector.broadcast %cst_101 : f32 to vector<8x1xf32>
    %347 = arith.addf %346, %345 : vector<8x1xf32>
    %348 = arith.divf %346, %347 : vector<8x1xf32>
    %cst_102 = arith.constant 2.000000e+00 : f32
    %349 = vector.broadcast %cst_102 : f32 to vector<8x1xf32>
    %350 = arith.mulf %349, %348 : vector<8x1xf32>
    %351 = vector.broadcast %350 : vector<8x1xf32> to vector<8x512xf32>
    %352 = arith.mulf %219, %351 : vector<8x512xf32>
    %cst_103 = arith.constant dense<0.000000e+00> : vector<512xf32>
    %353 = vector.multi_reduction <add>, %352, %cst_103 [0] : vector<8x512xf32> to vector<512xf32>
    %354 = vector.shape_cast %353 : vector<512xf32> to vector<1x512xf32>
    %355 = vector.broadcast %343 : vector<1x1xf32> to vector<1x512xf32>
    %356 = arith.addf %354, %355 : vector<1x512xf32>
    %cst_104 = arith.constant 0.000000e+00 : f32
    %357 = vector.broadcast %cst_104 : f32 to vector<1x512xf32>
    %358 = arith.cmpf oge, %356, %357 : vector<1x512xf32>
    %cst_105 = arith.constant 1.000000e+00 : f32
    %359 = vector.broadcast %cst_105 : f32 to vector<1x512xf32>
    %360 = arith.cmpf ole, %356, %359 : vector<1x512xf32>
    %361 = arith.andi %358, %360 : vector<1x512xi1>
    %cst_106 = arith.constant 0.000000e+00 : f32
    %362 = vector.broadcast %cst_106 : f32 to vector<1x512xf32>
    %363 = arith.select %361, %161, %362 : vector<1x512xi1>, vector<1x512xf32>
    %364 = vector.broadcast %363 : vector<1x512xf32> to vector<8x512xf32>
    %365 = arith.mulf %219, %364 : vector<8x512xf32>
    %cst_107 = arith.constant dense<0.000000e+00> : vector<8xf32>
    %366 = vector.multi_reduction <add>, %365, %cst_107 [1] : vector<8x512xf32> to vector<8xf32>
    %367 = vector.shape_cast %366 : vector<8xf32> to vector<8x1xf32>
    %cst_108 = arith.constant 1.000000e+00 : f32
    %368 = vector.broadcast %cst_108 : f32 to vector<8x1xf32>
    %369 = arith.subf %368, %348 : vector<8x1xf32>
    %370 = arith.mulf %350, %369 : vector<8x1xf32>
    %371 = arith.mulf %367, %370 : vector<8x1xf32>
    %cst_109 = arith.constant 1.000000e-01 : f32
    %372 = vector.broadcast %cst_109 : f32 to vector<8x1xf32>
    %373 = arith.mulf %372, %371 : vector<8x1xf32>
    %374 = arith.subf %335, %373 : vector<8x1xf32>
    %375 = vector.shape_cast %363 : vector<1x512xf32> to vector<1x1x512xf32>
    %cst_110 = arith.constant dense<0.000000e+00> : vector<1xf32>
    %376 = vector.multi_reduction <add>, %375, %cst_110 [1, 2] : vector<1x1x512xf32> to vector<1xf32>
    %377 = vector.shape_cast %376 : vector<1xf32> to vector<1x1x1xf32>
    %378 = vector.extract %377[0, 0, 0] : f32 from vector<1x1x1xf32>
    %379 = arith.mulf %378, %224 : f32
    %cst_111 = arith.constant 1.000000e-01 : f32
    %380 = arith.mulf %cst_111, %379 : f32
    %381 = vector.broadcast %380 : f32 to vector<1x1xf32>
    %382 = arith.subf %343, %381 : vector<1x1xf32>
    %383 = arith.negf %374 : vector<8x1xf32>
    %384 = math.exp %383 : vector<8x1xf32>
    %cst_112 = arith.constant 1.000000e+00 : f32
    %385 = vector.broadcast %cst_112 : f32 to vector<8x1xf32>
    %386 = arith.addf %385, %384 : vector<8x1xf32>
    %387 = arith.divf %385, %386 : vector<8x1xf32>
    %cst_113 = arith.constant 2.000000e+00 : f32
    %388 = vector.broadcast %cst_113 : f32 to vector<8x1xf32>
    %389 = arith.mulf %388, %387 : vector<8x1xf32>
    %390 = vector.broadcast %389 : vector<8x1xf32> to vector<8x512xf32>
    %391 = arith.mulf %219, %390 : vector<8x512xf32>
    %cst_114 = arith.constant dense<0.000000e+00> : vector<512xf32>
    %392 = vector.multi_reduction <add>, %391, %cst_114 [0] : vector<8x512xf32> to vector<512xf32>
    %393 = vector.shape_cast %392 : vector<512xf32> to vector<1x512xf32>
    %394 = vector.broadcast %382 : vector<1x1xf32> to vector<1x512xf32>
    %395 = arith.addf %393, %394 : vector<1x512xf32>
    %cst_115 = arith.constant 0.000000e+00 : f32
    %396 = vector.broadcast %cst_115 : f32 to vector<1x512xf32>
    %397 = arith.cmpf oge, %395, %396 : vector<1x512xf32>
    %cst_116 = arith.constant 1.000000e+00 : f32
    %398 = vector.broadcast %cst_116 : f32 to vector<1x512xf32>
    %399 = arith.cmpf ole, %395, %398 : vector<1x512xf32>
    %400 = arith.andi %397, %399 : vector<1x512xi1>
    %cst_117 = arith.constant 0.000000e+00 : f32
    %401 = vector.broadcast %cst_117 : f32 to vector<1x512xf32>
    %402 = arith.select %400, %161, %401 : vector<1x512xi1>, vector<1x512xf32>
    %403 = vector.broadcast %402 : vector<1x512xf32> to vector<8x512xf32>
    %404 = arith.mulf %219, %403 : vector<8x512xf32>
    %cst_118 = arith.constant dense<0.000000e+00> : vector<8xf32>
    %405 = vector.multi_reduction <add>, %404, %cst_118 [1] : vector<8x512xf32> to vector<8xf32>
    %406 = vector.shape_cast %405 : vector<8xf32> to vector<8x1xf32>
    %cst_119 = arith.constant 1.000000e+00 : f32
    %407 = vector.broadcast %cst_119 : f32 to vector<8x1xf32>
    %408 = arith.subf %407, %387 : vector<8x1xf32>
    %409 = arith.mulf %389, %408 : vector<8x1xf32>
    %410 = arith.mulf %406, %409 : vector<8x1xf32>
    %cst_120 = arith.constant 1.000000e-01 : f32
    %411 = vector.broadcast %cst_120 : f32 to vector<8x1xf32>
    %412 = arith.mulf %411, %410 : vector<8x1xf32>
    %413 = arith.subf %374, %412 : vector<8x1xf32>
    %414 = vector.shape_cast %402 : vector<1x512xf32> to vector<1x1x512xf32>
    %cst_121 = arith.constant dense<0.000000e+00> : vector<1xf32>
    %415 = vector.multi_reduction <add>, %414, %cst_121 [1, 2] : vector<1x1x512xf32> to vector<1xf32>
    %416 = vector.shape_cast %415 : vector<1xf32> to vector<1x1x1xf32>
    %417 = vector.extract %416[0, 0, 0] : f32 from vector<1x1x1xf32>
    %418 = arith.mulf %417, %224 : f32
    %cst_122 = arith.constant 1.000000e-01 : f32
    %419 = arith.mulf %cst_122, %418 : f32
    %420 = vector.broadcast %419 : f32 to vector<1x1xf32>
    %421 = arith.subf %382, %420 : vector<1x1xf32>
    %422 = arith.negf %413 : vector<8x1xf32>
    %423 = math.exp %422 : vector<8x1xf32>
    %cst_123 = arith.constant 1.000000e+00 : f32
    %424 = vector.broadcast %cst_123 : f32 to vector<8x1xf32>
    %425 = arith.addf %424, %423 : vector<8x1xf32>
    %426 = arith.divf %424, %425 : vector<8x1xf32>
    %cst_124 = arith.constant 2.000000e+00 : f32
    %427 = vector.broadcast %cst_124 : f32 to vector<8x1xf32>
    %428 = arith.mulf %427, %426 : vector<8x1xf32>
    %429 = vector.broadcast %428 : vector<8x1xf32> to vector<8x512xf32>
    %430 = arith.mulf %219, %429 : vector<8x512xf32>
    %cst_125 = arith.constant dense<0.000000e+00> : vector<512xf32>
    %431 = vector.multi_reduction <add>, %430, %cst_125 [0] : vector<8x512xf32> to vector<512xf32>
    %432 = vector.shape_cast %431 : vector<512xf32> to vector<1x512xf32>
    %433 = vector.broadcast %421 : vector<1x1xf32> to vector<1x512xf32>
    %434 = arith.addf %432, %433 : vector<1x512xf32>
    %cst_126 = arith.constant 0.000000e+00 : f32
    %435 = vector.broadcast %cst_126 : f32 to vector<1x512xf32>
    %436 = arith.cmpf oge, %434, %435 : vector<1x512xf32>
    %cst_127 = arith.constant 1.000000e+00 : f32
    %437 = vector.broadcast %cst_127 : f32 to vector<1x512xf32>
    %438 = arith.cmpf ole, %434, %437 : vector<1x512xf32>
    %439 = arith.andi %436, %438 : vector<1x512xi1>
    %cst_128 = arith.constant 0.000000e+00 : f32
    %440 = vector.broadcast %cst_128 : f32 to vector<1x512xf32>
    %441 = arith.select %439, %161, %440 : vector<1x512xi1>, vector<1x512xf32>
    %442 = vector.broadcast %441 : vector<1x512xf32> to vector<8x512xf32>
    %443 = arith.mulf %219, %442 : vector<8x512xf32>
    %cst_129 = arith.constant dense<0.000000e+00> : vector<8xf32>
    %444 = vector.multi_reduction <add>, %443, %cst_129 [1] : vector<8x512xf32> to vector<8xf32>
    %445 = vector.shape_cast %444 : vector<8xf32> to vector<8x1xf32>
    %cst_130 = arith.constant 1.000000e+00 : f32
    %446 = vector.broadcast %cst_130 : f32 to vector<8x1xf32>
    %447 = arith.subf %446, %426 : vector<8x1xf32>
    %448 = arith.mulf %428, %447 : vector<8x1xf32>
    %449 = arith.mulf %445, %448 : vector<8x1xf32>
    %cst_131 = arith.constant 1.000000e-01 : f32
    %450 = vector.broadcast %cst_131 : f32 to vector<8x1xf32>
    %451 = arith.mulf %450, %449 : vector<8x1xf32>
    %452 = arith.subf %413, %451 : vector<8x1xf32>
    %453 = vector.shape_cast %441 : vector<1x512xf32> to vector<1x1x512xf32>
    %cst_132 = arith.constant dense<0.000000e+00> : vector<1xf32>
    %454 = vector.multi_reduction <add>, %453, %cst_132 [1, 2] : vector<1x1x512xf32> to vector<1xf32>
    %455 = vector.shape_cast %454 : vector<1xf32> to vector<1x1x1xf32>
    %456 = vector.extract %455[0, 0, 0] : f32 from vector<1x1x1xf32>
    %457 = arith.mulf %456, %224 : f32
    %cst_133 = arith.constant 1.000000e-01 : f32
    %458 = arith.mulf %cst_133, %457 : f32
    %459 = vector.broadcast %458 : f32 to vector<1x1xf32>
    %460 = arith.subf %421, %459 : vector<1x1xf32>
    %461 = arith.negf %452 : vector<8x1xf32>
    %462 = math.exp %461 : vector<8x1xf32>
    %cst_134 = arith.constant 1.000000e+00 : f32
    %463 = vector.broadcast %cst_134 : f32 to vector<8x1xf32>
    %464 = arith.addf %463, %462 : vector<8x1xf32>
    %465 = arith.divf %463, %464 : vector<8x1xf32>
    %cst_135 = arith.constant 2.000000e+00 : f32
    %466 = vector.broadcast %cst_135 : f32 to vector<8x1xf32>
    %467 = arith.mulf %466, %465 : vector<8x1xf32>
    %468 = vector.broadcast %467 : vector<8x1xf32> to vector<8x512xf32>
    %469 = arith.mulf %219, %468 : vector<8x512xf32>
    %cst_136 = arith.constant dense<0.000000e+00> : vector<512xf32>
    %470 = vector.multi_reduction <add>, %469, %cst_136 [0] : vector<8x512xf32> to vector<512xf32>
    %471 = vector.shape_cast %470 : vector<512xf32> to vector<1x512xf32>
    %472 = vector.broadcast %460 : vector<1x1xf32> to vector<1x512xf32>
    %473 = arith.addf %471, %472 : vector<1x512xf32>
    %cst_137 = arith.constant 0.000000e+00 : f32
    %474 = vector.broadcast %cst_137 : f32 to vector<1x512xf32>
    %475 = arith.cmpf oge, %473, %474 : vector<1x512xf32>
    %cst_138 = arith.constant 1.000000e+00 : f32
    %476 = vector.broadcast %cst_138 : f32 to vector<1x512xf32>
    %477 = arith.cmpf ole, %473, %476 : vector<1x512xf32>
    %478 = arith.andi %475, %477 : vector<1x512xi1>
    %cst_139 = arith.constant 0.000000e+00 : f32
    %479 = vector.broadcast %cst_139 : f32 to vector<1x512xf32>
    %480 = arith.select %478, %161, %479 : vector<1x512xi1>, vector<1x512xf32>
    %481 = vector.broadcast %480 : vector<1x512xf32> to vector<8x512xf32>
    %482 = arith.mulf %219, %481 : vector<8x512xf32>
    %cst_140 = arith.constant dense<0.000000e+00> : vector<8xf32>
    %483 = vector.multi_reduction <add>, %482, %cst_140 [1] : vector<8x512xf32> to vector<8xf32>
    %484 = vector.shape_cast %483 : vector<8xf32> to vector<8x1xf32>
    %cst_141 = arith.constant 1.000000e+00 : f32
    %485 = vector.broadcast %cst_141 : f32 to vector<8x1xf32>
    %486 = arith.subf %485, %465 : vector<8x1xf32>
    %487 = arith.mulf %467, %486 : vector<8x1xf32>
    %488 = arith.mulf %484, %487 : vector<8x1xf32>
    %cst_142 = arith.constant 1.000000e-01 : f32
    %489 = vector.broadcast %cst_142 : f32 to vector<8x1xf32>
    %490 = arith.mulf %489, %488 : vector<8x1xf32>
    %491 = arith.subf %452, %490 : vector<8x1xf32>
    %492 = vector.shape_cast %480 : vector<1x512xf32> to vector<1x1x512xf32>
    %cst_143 = arith.constant dense<0.000000e+00> : vector<1xf32>
    %493 = vector.multi_reduction <add>, %492, %cst_143 [1, 2] : vector<1x1x512xf32> to vector<1xf32>
    %494 = vector.shape_cast %493 : vector<1xf32> to vector<1x1x1xf32>
    %495 = vector.extract %494[0, 0, 0] : f32 from vector<1x1x1xf32>
    %496 = arith.mulf %495, %224 : f32
    %cst_144 = arith.constant 1.000000e-01 : f32
    %497 = arith.mulf %cst_144, %496 : f32
    %498 = vector.broadcast %497 : f32 to vector<1x1xf32>
    %499 = arith.subf %460, %498 : vector<1x1xf32>
    %500 = arith.negf %491 : vector<8x1xf32>
    %501 = math.exp %500 : vector<8x1xf32>
    %cst_145 = arith.constant 1.000000e+00 : f32
    %502 = vector.broadcast %cst_145 : f32 to vector<8x1xf32>
    %503 = arith.addf %502, %501 : vector<8x1xf32>
    %504 = arith.divf %502, %503 : vector<8x1xf32>
    %cst_146 = arith.constant 2.000000e+00 : f32
    %505 = vector.broadcast %cst_146 : f32 to vector<8x1xf32>
    %506 = arith.mulf %505, %504 : vector<8x1xf32>
    %507 = vector.broadcast %506 : vector<8x1xf32> to vector<8x512xf32>
    %508 = arith.mulf %219, %507 : vector<8x512xf32>
    %cst_147 = arith.constant dense<0.000000e+00> : vector<512xf32>
    %509 = vector.multi_reduction <add>, %508, %cst_147 [0] : vector<8x512xf32> to vector<512xf32>
    %510 = vector.shape_cast %509 : vector<512xf32> to vector<1x512xf32>
    %511 = vector.broadcast %499 : vector<1x1xf32> to vector<1x512xf32>
    %512 = arith.addf %510, %511 : vector<1x512xf32>
    %cst_148 = arith.constant 0.000000e+00 : f32
    %513 = vector.broadcast %cst_148 : f32 to vector<1x512xf32>
    %514 = arith.cmpf oge, %512, %513 : vector<1x512xf32>
    %cst_149 = arith.constant 1.000000e+00 : f32
    %515 = vector.broadcast %cst_149 : f32 to vector<1x512xf32>
    %516 = arith.cmpf ole, %512, %515 : vector<1x512xf32>
    %517 = arith.andi %514, %516 : vector<1x512xi1>
    %cst_150 = arith.constant 0.000000e+00 : f32
    %518 = vector.broadcast %cst_150 : f32 to vector<1x512xf32>
    %519 = arith.select %517, %161, %518 : vector<1x512xi1>, vector<1x512xf32>
    %520 = vector.broadcast %519 : vector<1x512xf32> to vector<8x512xf32>
    %521 = arith.mulf %219, %520 : vector<8x512xf32>
    %cst_151 = arith.constant dense<0.000000e+00> : vector<8xf32>
    %522 = vector.multi_reduction <add>, %521, %cst_151 [1] : vector<8x512xf32> to vector<8xf32>
    %523 = vector.shape_cast %522 : vector<8xf32> to vector<8x1xf32>
    %cst_152 = arith.constant 1.000000e+00 : f32
    %524 = vector.broadcast %cst_152 : f32 to vector<8x1xf32>
    %525 = arith.subf %524, %504 : vector<8x1xf32>
    %526 = arith.mulf %506, %525 : vector<8x1xf32>
    %527 = arith.mulf %523, %526 : vector<8x1xf32>
    %cst_153 = arith.constant 1.000000e-01 : f32
    %528 = vector.broadcast %cst_153 : f32 to vector<8x1xf32>
    %529 = arith.mulf %528, %527 : vector<8x1xf32>
    %530 = arith.subf %491, %529 : vector<8x1xf32>
    %531 = vector.shape_cast %519 : vector<1x512xf32> to vector<1x1x512xf32>
    %cst_154 = arith.constant dense<0.000000e+00> : vector<1xf32>
    %532 = vector.multi_reduction <add>, %531, %cst_154 [1, 2] : vector<1x1x512xf32> to vector<1xf32>
    %533 = vector.shape_cast %532 : vector<1xf32> to vector<1x1x1xf32>
    %534 = vector.extract %533[0, 0, 0] : f32 from vector<1x1x1xf32>
    %535 = arith.mulf %534, %224 : f32
    %cst_155 = arith.constant 1.000000e-01 : f32
    %536 = arith.mulf %cst_155, %535 : f32
    %537 = vector.broadcast %536 : f32 to vector<1x1xf32>
    %538 = arith.subf %499, %537 : vector<1x1xf32>
    %539 = arith.negf %530 : vector<8x1xf32>
    %540 = math.exp %539 : vector<8x1xf32>
    %cst_156 = arith.constant 1.000000e+00 : f32
    %541 = vector.broadcast %cst_156 : f32 to vector<8x1xf32>
    %542 = arith.addf %541, %540 : vector<8x1xf32>
    %543 = arith.divf %541, %542 : vector<8x1xf32>
    %cst_157 = arith.constant 2.000000e+00 : f32
    %544 = vector.broadcast %cst_157 : f32 to vector<8x1xf32>
    %545 = arith.mulf %544, %543 : vector<8x1xf32>
    %546 = vector.broadcast %545 : vector<8x1xf32> to vector<8x512xf32>
    %547 = arith.mulf %219, %546 : vector<8x512xf32>
    %cst_158 = arith.constant dense<0.000000e+00> : vector<512xf32>
    %548 = vector.multi_reduction <add>, %547, %cst_158 [0] : vector<8x512xf32> to vector<512xf32>
    %549 = vector.shape_cast %548 : vector<512xf32> to vector<1x512xf32>
    %550 = vector.broadcast %538 : vector<1x1xf32> to vector<1x512xf32>
    %551 = arith.addf %549, %550 : vector<1x512xf32>
    %cst_159 = arith.constant 0.000000e+00 : f32
    %552 = vector.broadcast %cst_159 : f32 to vector<1x512xf32>
    %553 = arith.cmpf oge, %551, %552 : vector<1x512xf32>
    %cst_160 = arith.constant 1.000000e+00 : f32
    %554 = vector.broadcast %cst_160 : f32 to vector<1x512xf32>
    %555 = arith.cmpf ole, %551, %554 : vector<1x512xf32>
    %556 = arith.andi %553, %555 : vector<1x512xi1>
    %cst_161 = arith.constant 0.000000e+00 : f32
    %557 = vector.broadcast %cst_161 : f32 to vector<1x512xf32>
    %558 = arith.select %556, %161, %557 : vector<1x512xi1>, vector<1x512xf32>
    %559 = vector.broadcast %558 : vector<1x512xf32> to vector<8x512xf32>
    %560 = arith.mulf %219, %559 : vector<8x512xf32>
    %cst_162 = arith.constant dense<0.000000e+00> : vector<8xf32>
    %561 = vector.multi_reduction <add>, %560, %cst_162 [1] : vector<8x512xf32> to vector<8xf32>
    %562 = vector.shape_cast %561 : vector<8xf32> to vector<8x1xf32>
    %cst_163 = arith.constant 1.000000e+00 : f32
    %563 = vector.broadcast %cst_163 : f32 to vector<8x1xf32>
    %564 = arith.subf %563, %543 : vector<8x1xf32>
    %565 = arith.mulf %545, %564 : vector<8x1xf32>
    %566 = arith.mulf %562, %565 : vector<8x1xf32>
    %cst_164 = arith.constant 1.000000e-01 : f32
    %567 = vector.broadcast %cst_164 : f32 to vector<8x1xf32>
    %568 = arith.mulf %567, %566 : vector<8x1xf32>
    %569 = arith.subf %530, %568 : vector<8x1xf32>
    %570 = vector.shape_cast %558 : vector<1x512xf32> to vector<1x1x512xf32>
    %cst_165 = arith.constant dense<0.000000e+00> : vector<1xf32>
    %571 = vector.multi_reduction <add>, %570, %cst_165 [1, 2] : vector<1x1x512xf32> to vector<1xf32>
    %572 = vector.shape_cast %571 : vector<1xf32> to vector<1x1x1xf32>
    %573 = vector.extract %572[0, 0, 0] : f32 from vector<1x1x1xf32>
    %574 = arith.mulf %573, %224 : f32
    %cst_166 = arith.constant 1.000000e-01 : f32
    %575 = arith.mulf %cst_166, %574 : f32
    %576 = vector.broadcast %575 : f32 to vector<1x1xf32>
    %577 = arith.subf %538, %576 : vector<1x1xf32>
    %578 = arith.negf %569 : vector<8x1xf32>
    %579 = math.exp %578 : vector<8x1xf32>
    %cst_167 = arith.constant 1.000000e+00 : f32
    %580 = vector.broadcast %cst_167 : f32 to vector<8x1xf32>
    %581 = arith.addf %580, %579 : vector<8x1xf32>
    %582 = arith.divf %580, %581 : vector<8x1xf32>
    %cst_168 = arith.constant 2.000000e+00 : f32
    %583 = vector.broadcast %cst_168 : f32 to vector<8x1xf32>
    %584 = arith.mulf %583, %582 : vector<8x1xf32>
    %585 = vector.broadcast %584 : vector<8x1xf32> to vector<8x512xf32>
    %586 = arith.mulf %219, %585 : vector<8x512xf32>
    %cst_169 = arith.constant dense<0.000000e+00> : vector<512xf32>
    %587 = vector.multi_reduction <add>, %586, %cst_169 [0] : vector<8x512xf32> to vector<512xf32>
    %588 = vector.shape_cast %587 : vector<512xf32> to vector<1x512xf32>
    %589 = vector.broadcast %577 : vector<1x1xf32> to vector<1x512xf32>
    %590 = arith.addf %588, %589 : vector<1x512xf32>
    %cst_170 = arith.constant 0.000000e+00 : f32
    %cst_171 = arith.constant 1.000000e+00 : f32
    %591 = vector.broadcast %cst_170 : f32 to vector<1x512xf32>
    %592 = arith.maximumf %591, %590 : vector<1x512xf32>
    %593 = vector.broadcast %cst_171 : f32 to vector<1x512xf32>
    %594 = arith.minimumf %593, %592 : vector<1x512xf32>
    %c0_172 = arith.constant 0 : index
    %c0_173 = arith.constant 0 : index
    %595 = vector.load %arg7[%c0_172, %c0_173] : memref<1x512xf32, #tpu.memory_space<vmem>>, vector<1x512xf32>
    tpu.vector_store %arg7[%c0_172, %c0_173], %594 {strides = array<i32>} : memref<1x512xf32, #tpu.memory_space<vmem>>, vector<1x512xf32>,
    return
  }
}

</mosaic_0001>

<llo_original>
// kernel: test_time_model_forward.1
$region0: #{test_time_model_forward.1}
  #allocation0 [shape = 'u32[]', space=smem, size = 0x4, offset = 0x4, fixed_abs, tag = 'smem constant byte address 0x4 - core index']
  #allocation1 [shape = 'u32[72,128]{1,0:T(1,128)}', space=vmem, size = 0x9000, scoped, tag = 'internal scratch']
  #allocation2 [shape = 'f32[1,512]{1,0:T(1,128)}', space=vmem, size = 0x800, scoped, tag = 'scratch operand']
  #allocation3 [shape = 'f32[1,1]{1,0:T(1,128)S(1)}', space=vmem, size = 0x200, scoped, tag = 'scoped memory for test_time_model_forward.1']
  %s0 = inlined_call_operand.vmem [shape: f32[4,512], index: 0, kind: input, shape index: {}]
  %s1 = inlined_call_operand.vmem [shape: f32[36,18], index: 1, kind: input, shape index: {}]
  %s2 = inlined_call_operand.vmem [shape: f32[8,4], index: 2, kind: input, shape index: {}]
  %s3 = inlined_call_operand.vmem [shape: f32[8,1], index: 3, kind: input, shape index: {}]
  %s4 = inlined_call_operand.vmem [shape: f32[8,4], index: 4, kind: input, shape index: {}]
  %s5 = inlined_call_operand.vmem [shape: f32[8,1], index: 5, kind: input, shape index: {}]
  %s6 = inlined_call_operand.<no memory space> [shape: f32[1,1], index: 6, kind: input, shape index: {}]
  %s7 = inlined_call_operand.vmem [shape: f32[1,512], index: 7, kind: output, shape index: {}]
  %s8 = sld [smem:[#allocation0]]
  $region38: #{test_time_model_forward.1} parent=0
    _
  %s10 = ssub.s32 1, %s8
  %s11 = scalar_select 0, %s10, %s8
  %v12 = vstv %s6
  %13 = vst [vmem:[#allocation3] sm:$0x1] %v12
  // Predicated region
  $region2: #{test_time_model_forward.1} parent=0 // pred_check
    _
  $region3: #{test_time_model_forward.1} parent=0 // pred_check_branch
    %15 = sbr.rel (0) target = $region5
  $region4: #{test_time_model_forward.1} parent=0 // pred_region
    _
  $region5: #{test_time_model_forward.1} parent=0 // pred_fallthru
    _
  // Predicated region
  $region6: #{test_time_model_forward.1} parent=0 // pred_check
    _
  $region7: #{test_time_model_forward.1} parent=0 // pred_check_branch
    %17 = sbr.rel (0) target = $region9
  $region8: #{test_time_model_forward.1} parent=0 // pred_region
    _
  $region9: #{test_time_model_forward.1} parent=0 // pred_fallthru
    _
  // Predicated region
  $region10: #{test_time_model_forward.1} parent=0 // pred_check
    _
  $region11: #{test_time_model_forward.1} parent=0 // pred_check_branch
    %19 = sbr.rel (0) target = $region13
  $region12: #{test_time_model_forward.1} parent=0 // pred_region
    _
  $region13: #{test_time_model_forward.1} parent=0 // pred_fallthru
    _
  // Predicated region
  $region14: #{test_time_model_forward.1} parent=0 // pred_check
    _
  $region15: #{test_time_model_forward.1} parent=0 // pred_check_branch
    %21 = sbr.rel (0) target = $region17
  $region16: #{test_time_model_forward.1} parent=0 // pred_region
    _
  $region17: #{test_time_model_forward.1} parent=0 // pred_fallthru
    _
  // Predicated region
  $region18: #{test_time_model_forward.1} parent=0 // pred_check
    _
  $region19: #{test_time_model_forward.1} parent=0 // pred_check_branch
    %23 = sbr.rel (0) target = $region21
  $region20: #{test_time_model_forward.1} parent=0 // pred_region
    _
  $region21: #{test_time_model_forward.1} parent=0 // pred_fallthru
    _
  // Predicated region
  $region22: #{test_time_model_forward.1} parent=0 // pred_check
    _
  $region23: #{test_time_model_forward.1} parent=0 // pred_check_branch
    %25 = sbr.rel (0) target = $region25
  $region24: #{test_time_model_forward.1} parent=0 // pred_region
    _
  $region25: #{test_time_model_forward.1} parent=0 // pred_fallthru
    _
  // Predicated region
  $region26: #{test_time_model_forward.1} parent=0 // pred_check
    _
  $region27: #{test_time_model_forward.1} parent=0 // pred_check_branch
    %27 = sbr.rel (0) target = $region29
  $region28: #{test_time_model_forward.1} parent=0 // pred_region
    _
  $region29: #{test_time_model_forward.1} parent=0 // pred_fallthru
    _
  %v28 = vld [vmem:[%s1] sm:$0xff]
  %v29 = vld [vmem:[%s1 + $0x8] sm:$0xff]
  %v30 = vld [vmem:[%s1 + $0x10] sm:$0xff]
  %v31 = vld [vmem:[%s1 + $0x18] sm:$0xff]
  %v32 = vld [vmem:[%s1 + $0x20] sm:$0xf]
  %vm33 = vcmp.gt.f32.partialorder %v28, 0.75
  %vm34 = vcmp.gt.f32.partialorder %v29, 0.75
  %vm35 = vcmp.gt.f32.partialorder %v30, 0.75
  %vm36 = vcmp.gt.f32.partialorder %v31, 0.75
  %vm37 = vcmp.gt.f32.partialorder %v32, 0.75
  %v38 = vsel %vm33, 1, 0
  %v39 = vsel %vm34, 1, 0
  %v40 = vsel %vm35, 1, 0
  %v41 = vsel %vm36, 1, 0
  %v42 = vsel %vm37, 1, 0
  %v43 = vcvt.s32.f32 %v38
  %v44 = vcvt.s32.f32 %v39
  %v45 = vcvt.s32.f32 %v40
  %v46 = vcvt.s32.f32 %v41
  %v47 = vcvt.s32.f32 %v42
  %vm48 = vcmp.lt.f32.partialorder %v28, 0.25
  %vm49 = vcmp.lt.f32.partialorder %v29, 0.25
  %vm50 = vcmp.lt.f32.partialorder %v30, 0.25
  %vm51 = vcmp.lt.f32.partialorder %v31, 0.25
  %vm52 = vcmp.lt.f32.partialorder %v32, 0.25
  %v53 = vsel %vm48, 1, 0
  %v54 = vsel %vm49, 1, 0
  %v55 = vsel %vm50, 1, 0
  %v56 = vsel %vm51, 1, 0
  %v57 = vsel %vm52, 1, 0
  %v58 = vcvt.s32.f32 %v53
  %v59 = vcvt.s32.f32 %v54
  %v60 = vcvt.s32.f32 %v55
  %v61 = vcvt.s32.f32 %v56
  %v62 = vcvt.s32.f32 %v57
  %68 = vrot.lane.b32.xlu0 %v43, 127
  %v69 = vpop.permute.xlu0 %68
  %70 = vrot.lane.b32.xlu0 %v44, 127
  %v71 = vpop.permute.xlu0 %70
  %72 = vrot.lane.b32.xlu0 %v45, 127
  %v73 = vpop.permute.xlu0 %72
  %74 = vrot.lane.b32.xlu0 %v46, 127
  %v75 = vpop.permute.xlu0 %74
  %76 = vrot.lane.b32.xlu0 %v47, 127
  %v77 = vpop.permute.xlu0 %76
  %v83 = vadd.f32 %v43, %v69
  %v84 = vadd.f32 %v44, %v71
  %v85 = vadd.f32 %v45, %v73
  %v86 = vadd.f32 %v46, %v75
  %v87 = vadd.f32 %v47, %v77
  %88 = vrot.lane.b32.xlu0 %v43, 126
  %v89 = vpop.permute.xlu0 %88
  %90 = vrot.lane.b32.xlu0 %v44, 126
  %v91 = vpop.permute.xlu0 %90
  %92 = vrot.lane.b32.xlu0 %v45, 126
  %v93 = vpop.permute.xlu0 %92
  %94 = vrot.lane.b32.xlu0 %v46, 126
  %v95 = vpop.permute.xlu0 %94
  %96 = vrot.lane.b32.xlu0 %v47, 126
  %v97 = vpop.permute.xlu0 %96
  %v103 = vadd.f32 %v83, %v89
  %v104 = vadd.f32 %v84, %v91
  %v105 = vadd.f32 %v85, %v93
  %v106 = vadd.f32 %v86, %v95
  %v107 = vadd.f32 %v87, %v97
  %113 = vrot.lane.b32.xlu0 %v58, 127
  %v114 = vpop.permute.xlu0 %113
  %115 = vrot.lane.b32.xlu0 %v59, 127
  %v116 = vpop.permute.xlu0 %115
  %117 = vrot.lane.b32.xlu0 %v60, 127
  %v118 = vpop.permute.xlu0 %117
  %119 = vrot.lane.b32.xlu0 %v61, 127
  %v120 = vpop.permute.xlu0 %119
  %121 = vrot.lane.b32.xlu0 %v62, 127
  %v122 = vpop.permute.xlu0 %121
  %v128 = vadd.f32 %v58, %v114
  %v129 = vadd.f32 %v59, %v116
  %v130 = vadd.f32 %v60, %v118
  %v131 = vadd.f32 %v61, %v120
  %v132 = vadd.f32 %v62, %v122
  %133 = vrot.lane.b32.xlu0 %v58, 126
  %v134 = vpop.permute.xlu0 %133
  %135 = vrot.lane.b32.xlu0 %v59, 126
  %v136 = vpop.permute.xlu0 %135
  %137 = vrot.lane.b32.xlu0 %v60, 126
  %v138 = vpop.permute.xlu0 %137
  %139 = vrot.lane.b32.xlu0 %v61, 126
  %v140 = vpop.permute.xlu0 %139
  %141 = vrot.lane.b32.xlu0 %v62, 126
  %v142 = vpop.permute.xlu0 %141
  %v148 = vadd.f32 %v128, %v134
  %v149 = vadd.f32 %v129, %v136
  %v150 = vadd.f32 %v130, %v138
  %v151 = vadd.f32 %v131, %v140
  %v152 = vadd.f32 %v132, %v142
  %vm158 = vcmask 1046528
  %v159 = vrot.slane %v103, 1
  %v160 = vrot.slane %v104, 1
  %v161 = vsel %vm158, %v159, %v160
  %v162 = vrot.slane %v105, 1
  %v163 = vsel %vm158, %v160, %v162
  %v164 = vrot.slane %v106, 1
  %v165 = vsel %vm158, %v162, %v164
  %v166 = vrot.slane %v107, 1
  %v167 = vsel %vm158, %v164, %v166
  %v173 = vadd.f32 %v103, %v161
  %v174 = vadd.f32 %v104, %v163
  %v175 = vadd.f32 %v105, %v165
  %v176 = vadd.f32 %v106, %v167
  %v177 = vadd.f32 %v107, %v166
  %vm178 = vcmask 1045504
  %v179 = vrot.slane %v103, 2
  %v180 = vrot.slane %v104, 2
  %v181 = vsel %vm178, %v179, %v180
  %v182 = vrot.slane %v105, 2
  %v183 = vsel %vm178, %v180, %v182
  %v184 = vrot.slane %v106, 2
  %v185 = vsel %vm178, %v182, %v184
  %v186 = vrot.slane %v107, 2
  %v187 = vsel %vm178, %v184, %v186
  %v193 = vadd.f32 %v173, %v181
  %v194 = vadd.f32 %v174, %v183
  %v195 = vadd.f32 %v175, %v185
  %v196 = vadd.f32 %v176, %v187
  %v197 = vadd.f32 %v177, %v186
  %v203 = vrot.slane %v148, 1
  %v204 = vrot.slane %v149, 1
  %v205 = vsel %vm158, %v203, %v204
  %v206 = vrot.slane %v150, 1
  %v207 = vsel %vm158, %v204, %v206
  %v208 = vrot.slane %v151, 1
  %v209 = vsel %vm158, %v206, %v208
  %v210 = vrot.slane %v152, 1
  %v211 = vsel %vm158, %v208, %v210
  %v217 = vadd.f32 %v148, %v205
  %v218 = vadd.f32 %v149, %v207
  %v219 = vadd.f32 %v150, %v209
  %v220 = vadd.f32 %v151, %v211
  %v221 = vadd.f32 %v152, %v210
  %v222 = vrot.slane %v148, 2
  %v223 = vrot.slane %v149, 2
  %v224 = vsel %vm178, %v222, %v223
  %v225 = vrot.slane %v150, 2
  %v226 = vsel %vm178, %v223, %v225
  %v227 = vrot.slane %v151, 2
  %v228 = vsel %vm178, %v225, %v227
  %v229 = vrot.slane %v152, 2
  %v230 = vsel %vm178, %v227, %v229
  %v236 = vadd.f32 %v217, %v224
  %v237 = vadd.f32 %v218, %v226
  %v238 = vadd.f32 %v219, %v228
  %v239 = vadd.f32 %v220, %v230
  %v240 = vadd.f32 %v221, %v229
  %v241 = vsub.f32 1.0, %v43
  %v242 = vsub.f32 1.0, %v44
  %v243 = vsub.f32 1.0, %v45
  %v244 = vsub.f32 %v241, %v58
  %v245 = vsub.f32 %v242, %v59
  %v246 = vsub.f32 %v243, %v60
  %v247 = vmul.f32 %v43, 9.0
  %v248 = vmul.f32 %v44, 9.0
  %v249 = vmul.f32 %v45, 9.0
  %v253 = vrot.slane %v247, 1
  %v254 = vrot.slane %v248, 1
  %v255 = vsel %vm158, %v253, %v254
  %v256 = vrot.slane %v249, 1
  %v257 = vsel %vm158, %v254, %v256
  %258 = vrot.lane.b32.xlu0 %v255, 127
  %v259 = vpop.permute.xlu0 %258
  %260 = vrot.lane.b32.xlu0 %v257, 127
  %v261 = vpop.permute.xlu0 %260
  %v264 = vsub.f32 %v193, %v259
  %v265 = vsub.f32 %v194, %v261
  %v266 = vand.u32 2147483647, %v264
  %v267 = vand.u32 2147483647, %v265
  %v271 = vrot.slane %v244, 1
  %v272 = vrot.slane %v245, 1
  %v273 = vsel %vm158, %v271, %v272
  %v274 = vrot.slane %v246, 1
  %v275 = vsel %vm158, %v272, %v274
  %276 = vrot.lane.b32.xlu0 %v273, 127
  %v277 = vpop.permute.xlu0 %276
  %278 = vrot.lane.b32.xlu0 %v275, 127
  %v279 = vpop.permute.xlu0 %278
  %v282 = vmul.f32 %v266, %v277
  %v283 = vmul.f32 %v267, %v279
  %v284 = vmul.f32 %v58, 9.0
  %v285 = vmul.f32 %v59, 9.0
  %v286 = vmul.f32 %v60, 9.0
  %v290 = vrot.slane %v284, 1
  %v291 = vrot.slane %v285, 1
  %v292 = vsel %vm158, %v290, %v291
  %v293 = vrot.slane %v286, 1
  %v294 = vsel %vm158, %v291, %v293
  %295 = vrot.lane.b32.xlu0 %v292, 127
  %v296 = vpop.permute.xlu0 %295
  %297 = vrot.lane.b32.xlu0 %v294, 127
  %v298 = vpop.permute.xlu0 %297
  %v301 = vsub.f32 %v236, %v296
  %v302 = vsub.f32 %v237, %v298
  %v303 = vand.u32 2147483647, %v301
  %v304 = vand.u32 2147483647, %v302
  %v305 = vmul.f32 %v303, %v277
  %v306 = vmul.f32 %v304, %v279
  %vm307 = vcmask 130048
  %v308 = vsel %vm307, %v282, 0.0
  %v309 = vsel %vm307, %v283, 0.0
  %v310 = vadd.f32 %v308, %v309
  %311 = vadd.xlane.f32.xlu0 %v310
  %v312 = vpop.xlane.xlu0 %311
  %v313 = vrot.slane %v312, 4
  %v314 = vadd.f32 %v312, %v313
  %v315 = vrot.slane %v314, 2
  %v316 = vadd.f32 %v314, %v315
  %v317 = vrot.slane %v316, 1
  %v318 = vadd.f32 %v316, %v317
  %s319 = vtos %v318
  %s320 = sadd.f32 %s319, 0.0
  %v321 = vsel %vm307, %v305, 0.0
  %v322 = vsel %vm307, %v306, 0.0
  %v323 = vadd.f32 %v321, %v322
  %324 = vadd.xlane.f32.xlu0 %v323
  %v325 = vpop.xlane.xlu0 %324
  %v326 = vrot.slane %v325, 4
  %v327 = vadd.f32 %v325, %v326
  %v328 = vrot.slane %v327, 2
  %v329 = vadd.f32 %v327, %v328
  %v330 = vrot.slane %v329, 1
  %v331 = vadd.f32 %v329, %v330
  %s332 = vtos %v331
  %s333 = sadd.f32 %s332, 0.0
  %v334 = vsub.f32 1.0, %v46
  %v335 = vsub.f32 1.0, %v47
  %v336 = vsub.f32 %v334, %v61
  %v337 = vsub.f32 %v335, %v62
  %v338 = vmul.f32 %v46, 9.0
  %v339 = vmul.f32 %v47, 9.0
  %v342 = vrot.slane %v338, 1
  %v343 = vsel %vm158, %v256, %v342
  %v344 = vrot.slane %v339, 1
  %v345 = vsel %vm158, %v342, %v344
  %346 = vrot.lane.b32.xlu0 %v343, 127
  %v347 = vpop.permute.xlu0 %346
  %348 = vrot.lane.b32.xlu0 %v345, 127
  %v349 = vpop.permute.xlu0 %348
  %350 = vrot.lane.b32.xlu0 %v344, 127
  %v351 = vpop.permute.xlu0 %350
  %v355 = vsub.f32 %v195, %v347
  %v356 = vsub.f32 %v196, %v349
  %v357 = vsub.f32 %v197, %v351
  %v358 = vand.u32 2147483647, %v355
  %v359 = vand.u32 2147483647, %v356
  %v360 = vand.u32 2147483647, %v357
  %v363 = vrot.slane %v336, 1
  %v364 = vsel %vm158, %v274, %v363
  %v365 = vrot.slane %v337, 1
  %v366 = vsel %vm158, %v363, %v365
  %367 = vrot.lane.b32.xlu0 %v364, 127
  %v368 = vpop.permute.xlu0 %367
  %369 = vrot.lane.b32.xlu0 %v366, 127
  %v370 = vpop.permute.xlu0 %369
  %371 = vrot.lane.b32.xlu0 %v365, 127
  %v372 = vpop.permute.xlu0 %371
  %v376 = vmul.f32 %v358, %v368
  %v377 = vmul.f32 %v359, %v370
  %v378 = vmul.f32 %v360, %v372
  %v379 = vmul.f32 %v61, 9.0
  %v380 = vmul.f32 %v62, 9.0
  %v383 = vrot.slane %v379, 1
  %v384 = vsel %vm158, %v293, %v383
  %v385 = vrot.slane %v380, 1
  %v386 = vsel %vm158, %v383, %v385
  %387 = vrot.lane.b32.xlu0 %v384, 127
  %v388 = vpop.permute.xlu0 %387
  %389 = vrot.lane.b32.xlu0 %v386, 127
  %v390 = vpop.permute.xlu0 %389
  %391 = vrot.lane.b32.xlu0 %v385, 127
  %v392 = vpop.permute.xlu0 %391
  %v396 = vsub.f32 %v238, %v388
  %v397 = vsub.f32 %v239, %v390
  %v398 = vsub.f32 %v240, %v392
  %v399 = vand.u32 2147483647, %v396
  %v400 = vand.u32 2147483647, %v397
  %v401 = vand.u32 2147483647, %v398
  %v402 = vmul.f32 %v399, %v368
  %v403 = vmul.f32 %v400, %v370
  %v404 = vmul.f32 %v401, %v372
  %v408 = vrot.slane %v376, 2
  %v409 = vrot.slane %v377, 2
  %v410 = vsel %vm178, %v408, %v409
  %v411 = vrot.slane %v378, 2
  %v412 = vsel %vm178, %v409, %v411
  %v415 = vsel %vm307, %v410, 0.0
  %v416 = vsel %vm307, %v412, 0.0
  %v417 = vadd.f32 %v415, %v416
  %418 = vadd.xlane.f32.xlu0 %v417
  %v419 = vpop.xlane.xlu0 %418
  %v420 = vrot.slane %v419, 4
  %v421 = vadd.f32 %v419, %v420
  %v422 = vrot.slane %v421, 2
  %v423 = vadd.f32 %v421, %v422
  %v424 = vrot.slane %v423, 1
  %v425 = vadd.f32 %v423, %v424
  %s426 = vtos %v425
  %s427 = sadd.f32 %s320, %s426
  %v431 = vrot.slane %v402, 2
  %v432 = vrot.slane %v403, 2
  %v433 = vsel %vm178, %v431, %v432
  %v434 = vrot.slane %v404, 2
  %v435 = vsel %vm178, %v432, %v434
  %v438 = vsel %vm307, %v433, 0.0
  %v439 = vsel %vm307, %v435, 0.0
  %v440 = vadd.f32 %v438, %v439
  %441 = vadd.xlane.f32.xlu0 %v440
  %v442 = vpop.xlane.xlu0 %441
  %v443 = vrot.slane %v442, 4
  %v444 = vadd.f32 %v442, %v443
  %v445 = vrot.slane %v444, 2
  %v446 = vadd.f32 %v444, %v445
  %v447 = vrot.slane %v446, 1
  %v448 = vadd.f32 %v446, %v447
  %s449 = vtos %v448
  %s450 = sadd.f32 %s333, %s449
  %s451 = sadd.f32 %s427, 0.1
  %v452 = vstv %s451
  %v453 = vrcp.pop %v452
  %v454 = vmul.f32 %v452, %v453
  %v455 = vsub.f32 1.0, %v454
  %v456 = vmul.f32 %v453, %v455
  %v457 = vadd.f32 %v453, %v456
  %vm458 = vweird.f32 %v452
  %vm459 = vweird.f32 %v453
  %vm460 = vmor %vm458, %vm459
  %v461 = vsel %vm460, %v453, %v457
  %v462 = vand.u32 2147483647, %v452
  %vm463 = vcmp.eq.f32.partialorder %v462, 8.507059e+37
  %v464 = vand.u32 %v452, 2147483648
  %v465 = vor.u32 1.1754944e-38, %v464
  %v466 = vsel %vm463, %v465, %v461
  %s467 = vtos %v466
  %s468 = sadd.f32 %s450, 0.1
  %v469 = vstv %s468
  %v470 = vrcp.pop %v469
  %v471 = vmul.f32 %v469, %v470
  %v472 = vsub.f32 1.0, %v471
  %v473 = vmul.f32 %v470, %v472
  %v474 = vadd.f32 %v470, %v473
  %vm475 = vweird.f32 %v469
  %vm476 = vweird.f32 %v470
  %vm477 = vmor %vm475, %vm476
  %v478 = vsel %vm477, %v470, %v474
  %v479 = vand.u32 2147483647, %v469
  %vm480 = vcmp.eq.f32.partialorder %v479, 8.507059e+37
  %v481 = vand.u32 %v469, 2147483648
  %v482 = vor.u32 1.1754944e-38, %v481
  %v483 = vsel %vm480, %v482, %v478
  %s484 = vtos %v483
  %v485 = vstv %s484
  %v486 = vmul.f32 %v305, %v485
  %v487 = vmul.f32 %v306, %v485
  %v488 = vstv %s467
  %v489 = vmul.f32 %v282, %v488
  %v490 = vmul.f32 %v283, %v488
  %v491 = vsub.f32 %v486, %v489
  %v492 = vsub.f32 %v487, %v490
  %v493 = vlaneseq
  %vm494 = vcmp.ge.s32.totalorder %v493, 0
  %vm495 = vcmp.lt.s32.totalorder %v493, 16
  %vm496 = vmand %vm494, %vm495
  %497 = vst.msk [vmem:[#allocation2] sm:$0x1] %vm496, %v491
  %499 = vst [vmem:[#allocation1] sm:$0xff] %v491
  %s500 = scalar_lea.vmem [#allocation1], 1
  %v501 = vld [vmem:[%s500] ss:$9 sm:$0xff]
  %502 = vrot.lane.b32.xlu0 %v501, 16
  %v503 = vpop.permute.xlu0 %502
  %vm505 = vcmp.ge.s32.totalorder %v493, 16
  %vm506 = vcmp.lt.s32.totalorder %v493, 32
  %vm507 = vmand %vm505, %vm506
  %508 = vst.msk [vmem:[#allocation2] sm:$0x1] %vm507, %v503
  %509 = vst [vmem:[#allocation1] sm:$0xff] %v491
  %s510 = scalar_lea.vmem [#allocation1], 2
  %v511 = vld [vmem:[%s510] ss:$9 sm:$0xff]
  %512 = vrot.lane.b32.xlu0 %v511, 32
  %v513 = vpop.permute.xlu0 %512
  %vm515 = vcmp.ge.s32.totalorder %v493, 32
  %vm516 = vcmp.lt.s32.totalorder %v493, 48
  %vm517 = vmand %vm515, %vm516
  %518 = vst.msk [vmem:[#allocation2] sm:$0x1] %vm517, %v513
  %519 = vst [vmem:[#allocation1] sm:$0xff] %v491
  %s520 = scalar_lea.vmem [#allocation1], 3
  %v521 = vld [vmem:[%s520] ss:$9 sm:$0xff]
  %522 = vrot.lane.b32.xlu0 %v521, 48
  %v523 = vpop.permute.xlu0 %522
  %vm525 = vcmp.ge.s32.totalorder %v493, 48
  %vm526 = vcmp.lt.s32.totalorder %v493, 64
  %vm527 = vmand %vm525, %vm526
  %528 = vst.msk [vmem:[#allocation2] sm:$0x1] %vm527, %v523
  %529 = vst [vmem:[#allocation1] sm:$0xff] %v491
  %s530 = scalar_lea.vmem [#allocation1], 4
  %v531 = vld [vmem:[%s530] ss:$9 sm:$0xff]
  %532 = vrot.lane.b32.xlu0 %v531, 64
  %v533 = vpop.permute.xlu0 %532
  %vm535 = vcmp.ge.s32.totalorder %v493, 64
  %vm536 = vcmp.lt.s32.totalorder %v493, 80
  %vm537 = vmand %vm535, %vm536
  %538 = vst.msk [vmem:[#allocation2] sm:$0x1] %vm537, %v533
  %539 = vst [vmem:[#allocation1] sm:$0xff] %v491
  %s540 = scalar_lea.vmem [#allocation1], 5
  %v541 = vld [vmem:[%s540] ss:$9 sm:$0xff]
  %542 = vrot.lane.b32.xlu0 %v541, 80
  %v543 = vpop.permute.xlu0 %542
  %vm545 = vcmp.ge.s32.totalorder %v493, 80
  %vm546 = vcmp.lt.s32.totalorder %v493, 96
  %vm547 = vmand %vm545, %vm546
  %548 = vst.msk [vmem:[#allocation2] sm:$0x1] %vm547, %v543
  %549 = vst [vmem:[#allocation1] sm:$0xff] %v491
  %s550 = scalar_lea.vmem [#allocation1], 6
  %v551 = vld [vmem:[%s550] ss:$9 sm:$0xff]
  %552 = vrot.lane.b32.xlu0 %v551, 96
  %v553 = vpop.permute.xlu0 %552
  %vm555 = vcmp.ge.s32.totalorder %v493, 96
  %vm556 = vcmp.lt.s32.totalorder %v493, 112
  %vm557 = vmand %vm555, %vm556
  %558 = vst.msk [vmem:[#allocation2] sm:$0x1] %vm557, %v553
  %559 = vst [vmem:[#allocation1] sm:$0xff] %v491
  %s560 = scalar_lea.vmem [#allocation1], 7
  %v561 = vld [vmem:[%s560] ss:$9 sm:$0xff]
  %562 = vrot.lane.b32.xlu0 %v561, 112
  %v563 = vpop.permute.xlu0 %562
  %vm565 = vcmp.ge.s32.totalorder %v493, 112
  %vm566 = vcmp.lt.s32.totalorder %v493, 128
  %vm567 = vmand %vm565, %vm566
  %568 = vst.msk [vmem:[#allocation2] sm:$0x1] %vm567, %v563
  %569 = vst.msk [vmem:[#allocation2 + $0x1] sm:$0x1] %vm496, %v492
  %571 = vst [vmem:[#allocation1] sm:$0xff] %v492
  %s572 = scalar_lea.vmem [#allocation1], 1
  %v573 = vld [vmem:[%s572] ss:$9 sm:$0xff]
  %574 = vrot.lane.b32.xlu0 %v573, 16
  %v575 = vpop.permute.xlu0 %574
  %577 = vst.msk [vmem:[#allocation2 + $0x1] sm:$0x1] %vm507, %v575
  %578 = vst [vmem:[#allocation1] sm:$0xff] %v492
  %s579 = scalar_lea.vmem [#allocation1], 2
  %v580 = vld [vmem:[%s579] ss:$9 sm:$0xff]
  %581 = vrot.lane.b32.xlu0 %v580, 32
  %v582 = vpop.permute.xlu0 %581
  %584 = vst.msk [vmem:[#allocation2 + $0x1] sm:$0x1] %vm517, %v582
  %585 = vst [vmem:[#allocation1] sm:$0xff] %v492
  %s586 = scalar_lea.vmem [#allocation1], 3
  %v587 = vld [vmem:[%s586] ss:$9 sm:$0xff]
  %588 = vrot.lane.b32.xlu0 %v587, 48
  %v589 = vpop.permute.xlu0 %588
  %591 = vst.msk [vmem:[#allocation2 + $0x1] sm:$0x1] %vm527, %v589
  %592 = vst [vmem:[#allocation1] sm:$0xff] %v492
  %s593 = scalar_lea.vmem [#allocation1], 4
  %v594 = vld [vmem:[%s593] ss:$9 sm:$0xff]
  %595 = vrot.lane.b32.xlu0 %v594, 64
  %v596 = vpop.permute.xlu0 %595
  %598 = vst.msk [vmem:[#allocation2 + $0x1] sm:$0x1] %vm537, %v596
  %599 = vst [vmem:[#allocation1] sm:$0xff] %v492
  %s600 = scalar_lea.vmem [#allocation1], 5
  %v601 = vld [vmem:[%s600] ss:$9 sm:$0xff]
  %602 = vrot.lane.b32.xlu0 %v601, 80
  %v603 = vpop.permute.xlu0 %602
  %605 = vst.msk [vmem:[#allocation2 + $0x1] sm:$0x1] %vm547, %v603
  %606 = vst [vmem:[#allocation1] sm:$0xff] %v492
  %s607 = scalar_lea.vmem [#allocation1], 6
  %v608 = vld [vmem:[%s607] ss:$9 sm:$0xff]
  %609 = vrot.lane.b32.xlu0 %v608, 96
  %v610 = vpop.permute.xlu0 %609
  %612 = vst.msk [vmem:[#allocation2 + $0x1] sm:$0x1] %vm557, %v610
  %613 = vst [vmem:[#allocation1] sm:$0xff] %v492
  %s614 = scalar_lea.vmem [#allocation1], 7
  %v615 = vld [vmem:[%s614] ss:$9 sm:$0xff]
  %616 = vrot.lane.b32.xlu0 %v615, 112
  %v617 = vpop.permute.xlu0 %616
  %619 = vst.msk [vmem:[#allocation2 + $0x1] sm:$0x1] %vm567, %v617
  %v620 = vmul.f32 %v402, %v485
  %v621 = vmul.f32 %v403, %v485
  %v622 = vmul.f32 %v404, %v485
  %v623 = vmul.f32 %v376, %v488
  %v624 = vmul.f32 %v377, %v488
  %v625 = vmul.f32 %v378, %v488
  %v626 = vsub.f32 %v620, %v623
  %v627 = vsub.f32 %v621, %v624
  %v628 = vsub.f32 %v622, %v625
  %630 = vst [vmem:[#allocation1] sm:$0xff] %v626
  %s631 = scalar_lea.vmem [#allocation1], 2
  %v632 = vld [vmem:[%s631] ss:$9 sm:$0xff]
  %634 = vst.msk [vmem:[#allocation2 + $0x2] sm:$0x1] %vm496, %v632
  %635 = vst [vmem:[#allocation1] sm:$0xff] %v626
  %s636 = scalar_lea.vmem [#allocation1], 3
  %v637 = vld [vmem:[%s636] ss:$9 sm:$0xff]
  %638 = vrot.lane.b32.xlu0 %v637, 16
  %v639 = vpop.permute.xlu0 %638
  %641 = vst.msk [vmem:[#allocation2 + $0x2] sm:$0x1] %vm507, %v639
  %642 = vst [vmem:[#allocation1] sm:$0xff] %v626
  %s643 = scalar_lea.vmem [#allocation1], 4
  %v644 = vld [vmem:[%s643] ss:$9 sm:$0xff]
  %645 = vrot.lane.b32.xlu0 %v644, 32
  %v646 = vpop.permute.xlu0 %645
  %648 = vst.msk [vmem:[#allocation2 + $0x2] sm:$0x1] %vm517, %v646
  %649 = vst [vmem:[#allocation1] sm:$0xff] %v626
  %s650 = scalar_lea.vmem [#allocation1], 5
  %v651 = vld [vmem:[%s650] ss:$9 sm:$0xff]
  %652 = vrot.lane.b32.xlu0 %v651, 48
  %v653 = vpop.permute.xlu0 %652
  %655 = vst.msk [vmem:[#allocation2 + $0x2] sm:$0x1] %vm527, %v653
  %656 = vst [vmem:[#allocation1] sm:$0xff] %v626
  %s657 = scalar_lea.vmem [#allocation1], 6
  %v658 = vld [vmem:[%s657] ss:$9 sm:$0xff]
  %659 = vrot.lane.b32.xlu0 %v658, 64
  %v660 = vpop.permute.xlu0 %659
  %662 = vst.msk [vmem:[#allocation2 + $0x2] sm:$0x1] %vm537, %v660
  %663 = vst [vmem:[#allocation1] sm:$0xff] %v626
  %s664 = scalar_lea.vmem [#allocation1], 7
  %v665 = vld [vmem:[%s664] ss:$9 sm:$0xff]
  %666 = vrot.lane.b32.xlu0 %v665, 80
  %v667 = vpop.permute.xlu0 %666
  %669 = vst.msk [vmem:[#allocation2 + $0x2] sm:$0x1] %vm547, %v667
  %671 = vrot.lane.b32.xlu0 %v627, 96
  %v672 = vpop.permute.xlu0 %671
  %674 = vst.msk [vmem:[#allocation2 + $0x2] sm:$0x1] %vm557, %v672
  %675 = vst [vmem:[#allocation1] sm:$0xff] %v627
  %s676 = scalar_lea.vmem [#allocation1], 1
  %v677 = vld [vmem:[%s676] ss:$9 sm:$0xff]
  %678 = vrot.lane.b32.xlu0 %v677, 112
  %v679 = vpop.permute.xlu0 %678
  %681 = vst.msk [vmem:[#allocation2 + $0x2] sm:$0x1] %vm567, %v679
  %682 = vst [vmem:[#allocation1] sm:$0xff] %v627
  %s683 = scalar_lea.vmem [#allocation1], 2
  %v684 = vld [vmem:[%s683] ss:$9 sm:$0xff]
  %686 = vst.msk [vmem:[#allocation2 + $0x3] sm:$0x1] %vm496, %v684
  %687 = vst [vmem:[#allocation1] sm:$0xff] %v627
  %s688 = scalar_lea.vmem [#allocation1], 3
  %v689 = vld [vmem:[%s688] ss:$9 sm:$0xff]
  %690 = vrot.lane.b32.xlu0 %v689, 16
  %v691 = vpop.permute.xlu0 %690
  %693 = vst.msk [vmem:[#allocation2 + $0x3] sm:$0x1] %vm507, %v691
  %694 = vst [vmem:[#allocation1] sm:$0xff] %v627
  %s695 = scalar_lea.vmem [#allocation1], 4
  %v696 = vld [vmem:[%s695] ss:$9 sm:$0xff]
  %697 = vrot.lane.b32.xlu0 %v696, 32
  %v698 = vpop.permute.xlu0 %697
  %700 = vst.msk [vmem:[#allocation2 + $0x3] sm:$0x1] %vm517, %v698
  %701 = vst [vmem:[#allocation1] sm:$0xff] %v627
  %s702 = scalar_lea.vmem [#allocation1], 5
  %v703 = vld [vmem:[%s702] ss:$9 sm:$0xff]
  %704 = vrot.lane.b32.xlu0 %v703, 48
  %v705 = vpop.permute.xlu0 %704
  %707 = vst.msk [vmem:[#allocation2 + $0x3] sm:$0x1] %vm527, %v705
  %708 = vst [vmem:[#allocation1] sm:$0xff] %v627
  %s709 = scalar_lea.vmem [#allocation1], 6
  %v710 = vld [vmem:[%s709] ss:$9 sm:$0xff]
  %711 = vrot.lane.b32.xlu0 %v710, 64
  %v712 = vpop.permute.xlu0 %711
  %714 = vst.msk [vmem:[#allocation2 + $0x3] sm:$0x1] %vm537, %v712
  %715 = vst [vmem:[#allocation1] sm:$0xff] %v627
  %s716 = scalar_lea.vmem [#allocation1], 7
  %v717 = vld [vmem:[%s716] ss:$9 sm:$0xff]
  %718 = vrot.lane.b32.xlu0 %v717, 80
  %v719 = vpop.permute.xlu0 %718
  %721 = vst.msk [vmem:[#allocation2 + $0x3] sm:$0x1] %vm547, %v719
  %723 = vrot.lane.b32.xlu0 %v628, 96
  %v724 = vpop.permute.xlu0 %723
  %726 = vst.msk [vmem:[#allocation2 + $0x3] sm:$0x1] %vm557, %v724
  %727 = vst [vmem:[#allocation1] sm:$0xff] %v628
  %s728 = scalar_lea.vmem [#allocation1], 1
  %v729 = vld [vmem:[%s728] ss:$9 sm:$0xff]
  %730 = vrot.lane.b32.xlu0 %v729, 112
  %v731 = vpop.permute.xlu0 %730
  %733 = vst.msk [vmem:[#allocation2 + $0x3] sm:$0x1] %vm567, %v731
  %v734 = vld [vmem:[#allocation2] sm:$0xf]
  %v735 = vld [vmem:[%s0] sm:$0xff]
  %v736 = vld [vmem:[%s0 + $0x8] sm:$0xff]
  %v737 = vld [vmem:[%s2] sm:$0xff]
  %v738 = vld [vmem:[%s4] sm:$0xff]
  %v741 = vperm.slane %v735, 0
  %v742 = vperm.slane %v735, 4
  %v743 = vperm.slane %v736, 0
  %v744 = vperm.slane %v736, 4
  %v749 = vperm.slane %v741, 0
  %v750 = vperm.slane %v742, 0
  %v751 = vperm.slane %v743, 0
  %v752 = vperm.slane %v744, 0
  %754 = vset.pattern.permute.xlu0 0
  %755 = vperm.xlu0 %754, %v737
  %v756 = vpop.permute.xlu0 %755
  %v758 = vmul.f32 %v749, %v756
  %v759 = vmul.f32 %v750, %v756
  %v760 = vmul.f32 %v751, %v756
  %v761 = vmul.f32 %v752, %v756
  %763 = vset.pattern.permute.xlu0 0
  %764 = vperm.xlu0 %763, %v738
  %v765 = vpop.permute.xlu0 %764
  %v767 = vmul.f32 %v749, %v765
  %v768 = vmul.f32 %v750, %v765
  %v769 = vmul.f32 %v751, %v765
  %v770 = vmul.f32 %v752, %v765
  %v771 = vperm.slane %v735, 1
  %v772 = vperm.slane %v735, 5
  %v773 = vperm.slane %v736, 1
  %v774 = vperm.slane %v736, 5
  %v779 = vperm.slane %v771, 1
  %v780 = vperm.slane %v772, 1
  %v781 = vperm.slane %v773, 1
  %v782 = vperm.slane %v774, 1
  %783 = vset.pattern.permute.xlu0 1
  %784 = vperm.xlu0 %783, %v737
  %v785 = vpop.permute.xlu0 %784
  %v787 = vmul.f32 %v779, %v785
  %v788 = vmul.f32 %v780, %v785
  %v789 = vmul.f32 %v781, %v785
  %v790 = vmul.f32 %v782, %v785
  %v791 = vadd.f32 %v758, %v787
  %v792 = vadd.f32 %v759, %v788
  %v793 = vadd.f32 %v760, %v789
  %v794 = vadd.f32 %v761, %v790
  %795 = vset.pattern.permute.xlu0 1
  %796 = vperm.xlu0 %795, %v738
  %v797 = vpop.permute.xlu0 %796
  %v799 = vmul.f32 %v779, %v797
  %v800 = vmul.f32 %v780, %v797
  %v801 = vmul.f32 %v781, %v797
  %v802 = vmul.f32 %v782, %v797
  %v803 = vadd.f32 %v767, %v799
  %v804 = vadd.f32 %v768, %v800
  %v805 = vadd.f32 %v769, %v801
  %v806 = vadd.f32 %v770, %v802
  %v807 = vperm.slane %v735, 2
  %v808 = vperm.slane %v735, 6
  %v809 = vperm.slane %v736, 2
  %v810 = vperm.slane %v736, 6
  %v815 = vperm.slane %v807, 2
  %v816 = vperm.slane %v808, 2
  %v817 = vperm.slane %v809, 2
  %v818 = vperm.slane %v810, 2
  %819 = vset.pattern.permute.xlu0 2
  %820 = vperm.xlu0 %819, %v737
  %v821 = vpop.permute.xlu0 %820
  %v823 = vmul.f32 %v815, %v821
  %v824 = vmul.f32 %v816, %v821
  %v825 = vmul.f32 %v817, %v821
  %v826 = vmul.f32 %v818, %v821
  %v827 = vadd.f32 %v791, %v823
  %v828 = vadd.f32 %v792, %v824
  %v829 = vadd.f32 %v793, %v825
  %v830 = vadd.f32 %v794, %v826
  %831 = vset.pattern.permute.xlu0 2
  %832 = vperm.xlu0 %831, %v738
  %v833 = vpop.permute.xlu0 %832
  %v835 = vmul.f32 %v815, %v833
  %v836 = vmul.f32 %v816, %v833
  %v837 = vmul.f32 %v817, %v833
  %v838 = vmul.f32 %v818, %v833
  %v839 = vadd.f32 %v803, %v835
  %v840 = vadd.f32 %v804, %v836
  %v841 = vadd.f32 %v805, %v837
  %v842 = vadd.f32 %v806, %v838
  %v843 = vperm.slane %v735, 3
  %v844 = vperm.slane %v735, 7
  %v845 = vperm.slane %v736, 3
  %v846 = vperm.slane %v736, 7
  %v851 = vperm.slane %v843, 3
  %v852 = vperm.slane %v844, 3
  %v853 = vperm.slane %v845, 3
  %v854 = vperm.slane %v846, 3
  %855 = vset.pattern.permute.xlu0 3
  %856 = vperm.xlu0 %855, %v737
  %v857 = vpop.permute.xlu0 %856
  %v859 = vmul.f32 %v851, %v857
  %v860 = vmul.f32 %v852, %v857
  %v861 = vmul.f32 %v853, %v857
  %v862 = vmul.f32 %v854, %v857
  %v863 = vadd.f32 %v827, %v859
  %v864 = vadd.f32 %v828, %v860
  %v865 = vadd.f32 %v829, %v861
  %v866 = vadd.f32 %v830, %v862
  %867 = vset.pattern.permute.xlu0 3
  %868 = vperm.xlu0 %867, %v738
  %v869 = vpop.permute.xlu0 %868
  %v871 = vmul.f32 %v851, %v869
  %v872 = vmul.f32 %v852, %v869
  %v873 = vmul.f32 %v853, %v869
  %v874 = vmul.f32 %v854, %v869
  %v875 = vadd.f32 %v839, %v871
  %v876 = vadd.f32 %v840, %v872
  %v877 = vadd.f32 %v841, %v873
  %v878 = vadd.f32 %v842, %v874
  %v879 = vld [vmem:[%s3] sm:$0xff]
  %881 = vset.pattern.permute.xlu0 0
  %882 = vperm.xlu0 %881, %v879
  %v883 = vpop.permute.xlu0 %882
  %v885 = vadd.f32 %v863, %v883
  %v886 = vadd.f32 %v864, %v883
  %v887 = vadd.f32 %v865, %v883
  %v888 = vadd.f32 %v866, %v883
  %v889 = vmax.f32 %v885, 0.0
  %v890 = vmax.f32 %v886, 0.0
  %v891 = vmax.f32 %v887, 0.0
  %v892 = vmax.f32 %v888, 0.0
  %v893 = vadd.f32 %v889, %v875
  %v894 = vadd.f32 %v890, %v876
  %v895 = vadd.f32 %v891, %v877
  %v896 = vadd.f32 %v892, %v878
  %v897 = vld [vmem:[%s5] sm:$0xff]
  %899 = vset.pattern.permute.xlu0 0
  %900 = vperm.xlu0 %899, %v897
  %v901 = vpop.permute.xlu0 %900
  %v903 = vmul.f32 %v893, %v901
  %v904 = vmul.f32 %v894, %v901
  %v905 = vmul.f32 %v895, %v901
  %v906 = vmul.f32 %v896, %v901
  %v907 = vmul.f32 %v897, %v897
  %vm908 = vcmask 7168
  %v909 = vsel %vm908, %v907, 0.0
  %910 = vadd.xlane.f32.xlu0 %v909
  %v911 = vpop.xlane.xlu0 %910
  %v912 = vrot.slane %v911, 4
  %v913 = vadd.f32 %v911, %v912
  %v914 = vrot.slane %v913, 2
  %v915 = vadd.f32 %v913, %v914
  %v916 = vrot.slane %v915, 1
  %v917 = vadd.f32 %v915, %v916
  %s918 = vtos %v917
  %v919 = vld [vmem:[#allocation3] sm:$0x1]
  %v920 = vrot.slane %v903, 4
  %v921 = vadd.f32 %v903, %v920
  %v922 = vrot.slane %v921, 2
  %v923 = vadd.f32 %v921, %v922
  %v924 = vrot.slane %v923, 1
  %v925 = vadd.f32 %v923, %v924
  %v926 = vrot.slane %v904, 4
  %v927 = vadd.f32 %v904, %v926
  %v928 = vrot.slane %v927, 2
  %v929 = vadd.f32 %v927, %v928
  %v930 = vrot.slane %v929, 1
  %v931 = vadd.f32 %v929, %v930
  %v932 = vrot.slane %v905, 4
  %v933 = vadd.f32 %v905, %v932
  %v934 = vrot.slane %v933, 2
  %v935 = vadd.f32 %v933, %v934
  %v936 = vrot.slane %v935, 1
  %v937 = vadd.f32 %v935, %v936
  %v938 = vrot.slane %v906, 4
  %v939 = vadd.f32 %v906, %v938
  %v940 = vrot.slane %v939, 2
  %v941 = vadd.f32 %v939, %v940
  %v942 = vrot.slane %v941, 1
  %v943 = vadd.f32 %v941, %v942
  %945 = vset.pattern.permute.xlu0 0
  %946 = vperm.xlu0 %945, %v919
  %v947 = vpop.permute.xlu0 %946
  %v949 = vperm.slane %v947, 0
  %v950 = vadd.f32 %v925, %v949
  %v951 = vadd.f32 %v931, %v949
  %v952 = vadd.f32 %v937, %v949
  %v953 = vadd.f32 %v943, %v949
  %vm954 = vcmp.ge.f32.partialorder %v950, 0.0
  %vm955 = vcmp.ge.f32.partialorder %v951, 0.0
  %vm956 = vcmp.ge.f32.partialorder %v952, 0.0
  %vm957 = vcmp.ge.f32.partialorder %v953, 0.0
  %vm958 = vcmp.le.f32.partialorder %v950, 1.0
  %vm959 = vcmp.le.f32.partialorder %v951, 1.0
  %vm960 = vcmp.le.f32.partialorder %v952, 1.0
  %vm961 = vcmp.le.f32.partialorder %v953, 1.0
  %vm962 = vmand %vm954, %vm958
  %vm963 = vmand %vm955, %vm959
  %vm964 = vmand %vm956, %vm960
  %vm965 = vmand %vm957, %vm961
  %v967 = vperm.slane %v734, 0
  %v968 = vperm.slane %v734, 1
  %v969 = vperm.slane %v734, 2
  %v970 = vperm.slane %v734, 3
  %v975 = vsel %vm962, %v967, 0.0
  %v976 = vsel %vm963, %v968, 0.0
  %v977 = vsel %vm964, %v969, 0.0
  %v978 = vsel %vm965, %v970, 0.0
  %v979 = vperm.slane %v975, 0
  %v980 = vperm.slane %v976, 0
  %v981 = vperm.slane %v977, 0
  %v982 = vperm.slane %v978, 0
  %v983 = vmul.f32 %v903, %v979
  %v984 = vmul.f32 %v904, %v980
  %v985 = vmul.f32 %v905, %v981
  %v986 = vmul.f32 %v906, %v982
  %v987 = vadd.f32 %v983, %v984
  %v988 = vadd.f32 %v987, %v985
  %v989 = vadd.f32 %v988, %v986
  %990 = vadd.xlane.f32.xlu0 %v989
  %v991 = vpop.xlane.xlu0 %990
  %v992 = vmul.f32 %v991, 0.5
  %v993 = vmul.f32 %v992, 0.1
  %v994 = vsub.f32 0.0, %v993
  %vm995 = vcmask 1040384
  %v996 = vsel %vm995, %v975, 0.0
  %v997 = vsel %vm995, %v976, 0.0
  %v998 = vadd.f32 %v996, %v997
  %v999 = vsel %vm995, %v977, 0.0
  %v1000 = vadd.f32 %v998, %v999
  %v1001 = vsel %vm995, %v978, 0.0
  %v1002 = vadd.f32 %v1000, %v1001
  %1003 = vadd.xlane.f32.xlu0 %v1002
  %v1004 = vpop.xlane.xlu0 %1003
  %v1005 = vrot.slane %v1004, 4
  %v1006 = vadd.f32 %v1004, %v1005
  %v1007 = vrot.slane %v1006, 2
  %v1008 = vadd.f32 %v1006, %v1007
  %v1009 = vrot.slane %v1008, 1
  %v1010 = vadd.f32 %v1008, %v1009
  %s1011 = vtos %v1010
  %s1012 = smul.f32 %s1011, %s918
  %s1013 = smul.f32 %s1012, 0.1
  %v1014 = vstv %s1013
  %v1015 = vsub.f32 %v919, %v1014
  %v1016 = vxor.u32 %v994, 2147483648
  %v1017 = vmul.f32 %v1016, 1.442695
  %v1018 = vpow.pop %v1017
  %v1019 = vadd.f32 %v1018, 1.0
  %v1020 = vrcp.pop %v1019
  %v1021 = vmul.f32 %v1019, %v1020
  %v1022 = vsub.f32 1.0, %v1021
  %v1023 = vmul.f32 %v1020, %v1022
  %v1024 = vadd.f32 %v1020, %v1023
  %vm1025 = vweird.f32 %v1019
  %vm1026 = vweird.f32 %v1020
  %vm1027 = vmor %vm1025, %vm1026
  %v1028 = vsel %vm1027, %v1020, %v1024
  %v1029 = vand.u32 2147483647, %v1019
  %vm1030 = vcmp.eq.f32.partialorder %v1029, 8.507059e+37
  %v1031 = vand.u32 %v1019, 2147483648
  %v1032 = vor.u32 1.1754944e-38, %v1031
  %v1033 = vsel %vm1030, %v1032, %v1028
  %v1034 = vmul.f32 1.0, %v1033
  %v1035 = vmul.f32 %v1034, 2.0
  %v1036 = vmul.f32 %v903, %v1035
  %v1037 = vmul.f32 %v904, %v1035
  %v1038 = vmul.f32 %v905, %v1035
  %v1039 = vmul.f32 %v906, %v1035
  %v1040 = vrot.slane %v1036, 4
  %v1041 = vadd.f32 %v1036, %v1040
  %v1042 = vrot.slane %v1041, 2
  %v1043 = vadd.f32 %v1041, %v1042
  %v1044 = vrot.slane %v1043, 1
  %v1045 = vadd.f32 %v1043, %v1044
  %v1046 = vrot.slane %v1037, 4
  %v1047 = vadd.f32 %v1037, %v1046
  %v1048 = vrot.slane %v1047, 2
  %v1049 = vadd.f32 %v1047, %v1048
  %v1050 = vrot.slane %v1049, 1
  %v1051 = vadd.f32 %v1049, %v1050
  %v1052 = vrot.slane %v1038, 4
  %v1053 = vadd.f32 %v1038, %v1052
  %v1054 = vrot.slane %v1053, 2
  %v1055 = vadd.f32 %v1053, %v1054
  %v1056 = vrot.slane %v1055, 1
  %v1057 = vadd.f32 %v1055, %v1056
  %v1058 = vrot.slane %v1039, 4
  %v1059 = vadd.f32 %v1039, %v1058
  %v1060 = vrot.slane %v1059, 2
  %v1061 = vadd.f32 %v1059, %v1060
  %v1062 = vrot.slane %v1061, 1
  %v1063 = vadd.f32 %v1061, %v1062
  %1065 = vset.pattern.permute.xlu0 0
  %1066 = vperm.xlu0 %1065, %v1015
  %v1067 = vpop.permute.xlu0 %1066
  %v1069 = vperm.slane %v1067, 0
  %v1070 = vadd.f32 %v1045, %v1069
  %v1071 = vadd.f32 %v1051, %v1069
  %v1072 = vadd.f32 %v1057, %v1069
  %v1073 = vadd.f32 %v1063, %v1069
  %vm1074 = vcmp.ge.f32.partialorder %v1070, 0.0
  %vm1075 = vcmp.ge.f32.partialorder %v1071, 0.0
  %vm1076 = vcmp.ge.f32.partialorder %v1072, 0.0
  %vm1077 = vcmp.ge.f32.partialorder %v1073, 0.0
  %vm1078 = vcmp.le.f32.partialorder %v1070, 1.0
  %vm1079 = vcmp.le.f32.partialorder %v1071, 1.0
  %vm1080 = vcmp.le.f32.partialorder %v1072, 1.0
  %vm1081 = vcmp.le.f32.partialorder %v1073, 1.0
  %vm1082 = vmand %vm1074, %vm1078
  %vm1083 = vmand %vm1075, %vm1079
  %vm1084 = vmand %vm1076, %vm1080
  %vm1085 = vmand %vm1077, %vm1081
  %v1086 = vsel %vm1082, %v967, 0.0
  %v1087 = vsel %vm1083, %v968, 0.0
  %v1088 = vsel %vm1084, %v969, 0.0
  %v1089 = vsel %vm1085, %v970, 0.0
  %v1090 = vperm.slane %v1086, 0
  %v1091 = vperm.slane %v1087, 0
  %v1092 = vperm.slane %v1088, 0
  %v1093 = vperm.slane %v1089, 0
  %v1094 = vmul.f32 %v903, %v1090
  %v1095 = vmul.f32 %v904, %v1091
  %v1096 = vmul.f32 %v905, %v1092
  %v1097 = vmul.f32 %v906, %v1093
  %v1098 = vadd.f32 %v1094, %v1095
  %v1099 = vadd.f32 %v1098, %v1096
  %v1100 = vadd.f32 %v1099, %v1097
  %1101 = vadd.xlane.f32.xlu0 %v1100
  %v1102 = vpop.xlane.xlu0 %1101
  %v1103 = vsub.f32 1.0, %v1034
  %v1104 = vmul.f32 %v1035, %v1103
  %v1105 = vmul.f32 %v1102, %v1104
  %v1106 = vmul.f32 %v1105, 0.1
  %v1107 = vsub.f32 %v994, %v1106
  %v1108 = vsel %vm995, %v1086, 0.0
  %v1109 = vsel %vm995, %v1087, 0.0
  %v1110 = vadd.f32 %v1108, %v1109
  %v1111 = vsel %vm995, %v1088, 0.0
  %v1112 = vadd.f32 %v1110, %v1111
  %v1113 = vsel %vm995, %v1089, 0.0
  %v1114 = vadd.f32 %v1112, %v1113
  %1115 = vadd.xlane.f32.xlu0 %v1114
  %v1116 = vpop.xlane.xlu0 %1115
  %v1117 = vrot.slane %v1116, 4
  %v1118 = vadd.f32 %v1116, %v1117
  %v1119 = vrot.slane %v1118, 2
  %v1120 = vadd.f32 %v1118, %v1119
  %v1121 = vrot.slane %v1120, 1
  %v1122 = vadd.f32 %v1120, %v1121
  %s1123 = vtos %v1122
  %s1124 = smul.f32 %s1123, %s918
  %s1125 = smul.f32 %s1124, 0.1
  %v1126 = vstv %s1125
  %v1127 = vsub.f32 %v1015, %v1126
  %v1128 = vxor.u32 %v1107, 2147483648
  %v1129 = vmul.f32 %v1128, 1.442695
  %v1130 = vpow.pop %v1129
  %v1131 = vadd.f32 %v1130, 1.0
  %v1132 = vrcp.pop %v1131
  %v1133 = vmul.f32 %v1131, %v1132
  %v1134 = vsub.f32 1.0, %v1133
  %v1135 = vmul.f32 %v1132, %v1134
  %v1136 = vadd.f32 %v1132, %v1135
  %vm1137 = vweird.f32 %v1131
  %vm1138 = vweird.f32 %v1132
  %vm1139 = vmor %vm1137, %vm1138
  %v1140 = vsel %vm1139, %v1132, %v1136
  %v1141 = vand.u32 2147483647, %v1131
  %vm1142 = vcmp.eq.f32.partialorder %v1141, 8.507059e+37
  %v1143 = vand.u32 %v1131, 2147483648
  %v1144 = vor.u32 1.1754944e-38, %v1143
  %v1145 = vsel %vm1142, %v1144, %v1140
  %v1146 = vmul.f32 1.0, %v1145
  %v1147 = vmul.f32 %v1146, 2.0
  %v1148 = vmul.f32 %v903, %v1147
  %v1149 = vmul.f32 %v904, %v1147
  %v1150 = vmul.f32 %v905, %v1147
  %v1151 = vmul.f32 %v906, %v1147
  %v1152 = vrot.slane %v1148, 4
  %v1153 = vadd.f32 %v1148, %v1152
  %v1154 = vrot.slane %v1153, 2
  %v1155 = vadd.f32 %v1153, %v1154
  %v1156 = vrot.slane %v1155, 1
  %v1157 = vadd.f32 %v1155, %v1156
  %v1158 = vrot.slane %v1149, 4
  %v1159 = vadd.f32 %v1149, %v1158
  %v1160 = vrot.slane %v1159, 2
  %v1161 = vadd.f32 %v1159, %v1160
  %v1162 = vrot.slane %v1161, 1
  %v1163 = vadd.f32 %v1161, %v1162
  %v1164 = vrot.slane %v1150, 4
  %v1165 = vadd.f32 %v1150, %v1164
  %v1166 = vrot.slane %v1165, 2
  %v1167 = vadd.f32 %v1165, %v1166
  %v1168 = vrot.slane %v1167, 1
  %v1169 = vadd.f32 %v1167, %v1168
  %v1170 = vrot.slane %v1151, 4
  %v1171 = vadd.f32 %v1151, %v1170
  %v1172 = vrot.slane %v1171, 2
  %v1173 = vadd.f32 %v1171, %v1172
  %v1174 = vrot.slane %v1173, 1
  %v1175 = vadd.f32 %v1173, %v1174
  %1177 = vset.pattern.permute.xlu0 0
  %1178 = vperm.xlu0 %1177, %v1127
  %v1179 = vpop.permute.xlu0 %1178
  %v1181 = vperm.slane %v1179, 0
  %v1182 = vadd.f32 %v1157, %v1181
  %v1183 = vadd.f32 %v1163, %v1181
  %v1184 = vadd.f32 %v1169, %v1181
  %v1185 = vadd.f32 %v1175, %v1181
  %vm1186 = vcmp.ge.f32.partialorder %v1182, 0.0
  %vm1187 = vcmp.ge.f32.partialorder %v1183, 0.0
  %vm1188 = vcmp.ge.f32.partialorder %v1184, 0.0
  %vm1189 = vcmp.ge.f32.partialorder %v1185, 0.0
  %vm1190 = vcmp.le.f32.partialorder %v1182, 1.0
  %vm1191 = vcmp.le.f32.partialorder %v1183, 1.0
  %vm1192 = vcmp.le.f32.partialorder %v1184, 1.0
  %vm1193 = vcmp.le.f32.partialorder %v1185, 1.0
  %vm1194 = vmand %vm1186, %vm1190
  %vm1195 = vmand %vm1187, %vm1191
  %vm1196 = vmand %vm1188, %vm1192
  %vm1197 = vmand %vm1189, %vm1193
  %v1198 = vsel %vm1194, %v967, 0.0
  %v1199 = vsel %vm1195, %v968, 0.0
  %v1200 = vsel %vm1196, %v969, 0.0
  %v1201 = vsel %vm1197, %v970, 0.0
  %v1202 = vperm.slane %v1198, 0
  %v1203 = vperm.slane %v1199, 0
  %v1204 = vperm.slane %v1200, 0
  %v1205 = vperm.slane %v1201, 0
  %v1206 = vmul.f32 %v903, %v1202
  %v1207 = vmul.f32 %v904, %v1203
  %v1208 = vmul.f32 %v905, %v1204
  %v1209 = vmul.f32 %v906, %v1205
  %v1210 = vadd.f32 %v1206, %v1207
  %v1211 = vadd.f32 %v1210, %v1208
  %v1212 = vadd.f32 %v1211, %v1209
  %1213 = vadd.xlane.f32.xlu0 %v1212
  %v1214 = vpop.xlane.xlu0 %1213
  %v1215 = vsub.f32 1.0, %v1146
  %v1216 = vmul.f32 %v1147, %v1215
  %v1217 = vmul.f32 %v1214, %v1216
  %v1218 = vmul.f32 %v1217, 0.1
  %v1219 = vsub.f32 %v1107, %v1218
  %v1220 = vsel %vm995, %v1198, 0.0
  %v1221 = vsel %vm995, %v1199, 0.0
  %v1222 = vadd.f32 %v1220, %v1221
  %v1223 = vsel %vm995, %v1200, 0.0
  %v1224 = vadd.f32 %v1222, %v1223
  %v1225 = vsel %vm995, %v1201, 0.0
  %v1226 = vadd.f32 %v1224, %v1225
  %1227 = vadd.xlane.f32.xlu0 %v1226
  %v1228 = vpop.xlane.xlu0 %1227
  %v1229 = vrot.slane %v1228, 4
  %v1230 = vadd.f32 %v1228, %v1229
  %v1231 = vrot.slane %v1230, 2
  %v1232 = vadd.f32 %v1230, %v1231
  %v1233 = vrot.slane %v1232, 1
  %v1234 = vadd.f32 %v1232, %v1233
  %s1235 = vtos %v1234
  %s1236 = smul.f32 %s1235, %s918
  %s1237 = smul.f32 %s1236, 0.1
  %v1238 = vstv %s1237
  %v1239 = vsub.f32 %v1127, %v1238
  %v1240 = vxor.u32 %v1219, 2147483648
  %v1241 = vmul.f32 %v1240, 1.442695
  %v1242 = vpow.pop %v1241
  %v1243 = vadd.f32 %v1242, 1.0
  %v1244 = vrcp.pop %v1243
  %v1245 = vmul.f32 %v1243, %v1244
  %v1246 = vsub.f32 1.0, %v1245
  %v1247 = vmul.f32 %v1244, %v1246
  %v1248 = vadd.f32 %v1244, %v1247
  %vm1249 = vweird.f32 %v1243
  %vm1250 = vweird.f32 %v1244
  %vm1251 = vmor %vm1249, %vm1250
  %v1252 = vsel %vm1251, %v1244, %v1248
  %v1253 = vand.u32 2147483647, %v1243
  %vm1254 = vcmp.eq.f32.partialorder %v1253, 8.507059e+37
  %v1255 = vand.u32 %v1243, 2147483648
  %v1256 = vor.u32 1.1754944e-38, %v1255
  %v1257 = vsel %vm1254, %v1256, %v1252
  %v1258 = vmul.f32 1.0, %v1257
  %v1259 = vmul.f32 %v1258, 2.0
  %v1260 = vmul.f32 %v903, %v1259
  %v1261 = vmul.f32 %v904, %v1259
  %v1262 = vmul.f32 %v905, %v1259
  %v1263 = vmul.f32 %v906, %v1259
  %v1264 = vrot.slane %v1260, 4
  %v1265 = vadd.f32 %v1260, %v1264
  %v1266 = vrot.slane %v1265, 2
  %v1267 = vadd.f32 %v1265, %v1266
  %v1268 = vrot.slane %v1267, 1
  %v1269 = vadd.f32 %v1267, %v1268
  %v1270 = vrot.slane %v1261, 4
  %v1271 = vadd.f32 %v1261, %v1270
  %v1272 = vrot.slane %v1271, 2
  %v1273 = vadd.f32 %v1271, %v1272
  %v1274 = vrot.slane %v1273, 1
  %v1275 = vadd.f32 %v1273, %v1274
  %v1276 = vrot.slane %v1262, 4
  %v1277 = vadd.f32 %v1262, %v1276
  %v1278 = vrot.slane %v1277, 2
  %v1279 = vadd.f32 %v1277, %v1278
  %v1280 = vrot.slane %v1279, 1
  %v1281 = vadd.f32 %v1279, %v1280
  %v1282 = vrot.slane %v1263, 4
  %v1283 = vadd.f32 %v1263, %v1282
  %v1284 = vrot.slane %v1283, 2
  %v1285 = vadd.f32 %v1283, %v1284
  %v1286 = vrot.slane %v1285, 1
  %v1287 = vadd.f32 %v1285, %v1286
  %1289 = vset.pattern.permute.xlu0 0
  %1290 = vperm.xlu0 %1289, %v1239
  %v1291 = vpop.permute.xlu0 %1290
  %v1293 = vperm.slane %v1291, 0
  %v1294 = vadd.f32 %v1269, %v1293
  %v1295 = vadd.f32 %v1275, %v1293
  %v1296 = vadd.f32 %v1281, %v1293
  %v1297 = vadd.f32 %v1287, %v1293
  %vm1298 = vcmp.ge.f32.partialorder %v1294, 0.0
  %vm1299 = vcmp.ge.f32.partialorder %v1295, 0.0
  %vm1300 = vcmp.ge.f32.partialorder %v1296, 0.0
  %vm1301 = vcmp.ge.f32.partialorder %v1297, 0.0
  %vm1302 = vcmp.le.f32.partialorder %v1294, 1.0
  %vm1303 = vcmp.le.f32.partialorder %v1295, 1.0
  %vm1304 = vcmp.le.f32.partialorder %v1296, 1.0
  %vm1305 = vcmp.le.f32.partialorder %v1297, 1.0
  %vm1306 = vmand %vm1298, %vm1302
  %vm1307 = vmand %vm1299, %vm1303
  %vm1308 = vmand %vm1300, %vm1304
  %vm1309 = vmand %vm1301, %vm1305
  %v1310 = vsel %vm1306, %v967, 0.0
  %v1311 = vsel %vm1307, %v968, 0.0
  %v1312 = vsel %vm1308, %v969, 0.0
  %v1313 = vsel %vm1309, %v970, 0.0
  %v1314 = vperm.slane %v1310, 0
  %v1315 = vperm.slane %v1311, 0
  %v1316 = vperm.slane %v1312, 0
  %v1317 = vperm.slane %v1313, 0
  %v1318 = vmul.f32 %v903, %v1314
  %v1319 = vmul.f32 %v904, %v1315
  %v1320 = vmul.f32 %v905, %v1316
  %v1321 = vmul.f32 %v906, %v1317
  %v1322 = vadd.f32 %v1318, %v1319
  %v1323 = vadd.f32 %v1322, %v1320
  %v1324 = vadd.f32 %v1323, %v1321
  %1325 = vadd.xlane.f32.xlu0 %v1324
  %v1326 = vpop.xlane.xlu0 %1325
  %v1327 = vsub.f32 1.0, %v1258
  %v1328 = vmul.f32 %v1259, %v1327
  %v1329 = vmul.f32 %v1326, %v1328
  %v1330 = vmul.f32 %v1329, 0.1
  %v1331 = vsub.f32 %v1219, %v1330
  %v1332 = vsel %vm995, %v1310, 0.0
  %v1333 = vsel %vm995, %v1311, 0.0
  %v1334 = vadd.f32 %v1332, %v1333
  %v1335 = vsel %vm995, %v1312, 0.0
  %v1336 = vadd.f32 %v1334, %v1335
  %v1337 = vsel %vm995, %v1313, 0.0
  %v1338 = vadd.f32 %v1336, %v1337
  %1339 = vadd.xlane.f32.xlu0 %v1338
  %v1340 = vpop.xlane.xlu0 %1339
  %v1341 = vrot.slane %v1340, 4
  %v1342 = vadd.f32 %v1340, %v1341
  %v1343 = vrot.slane %v1342, 2
  %v1344 = vadd.f32 %v1342, %v1343
  %v1345 = vrot.slane %v1344, 1
  %v1346 = vadd.f32 %v1344, %v1345
  %s1347 = vtos %v1346
  %s1348 = smul.f32 %s1347, %s918
  %s1349 = smul.f32 %s1348, 0.1
  %v1350 = vstv %s1349
  %v1351 = vsub.f32 %v1239, %v1350
  %v1352 = vxor.u32 %v1331, 2147483648
  %v1353 = vmul.f32 %v1352, 1.442695
  %v1354 = vpow.pop %v1353
  %v1355 = vadd.f32 %v1354, 1.0
  %v1356 = vrcp.pop %v1355
  %v1357 = vmul.f32 %v1355, %v1356
  %v1358 = vsub.f32 1.0, %v1357
  %v1359 = vmul.f32 %v1356, %v1358
  %v1360 = vadd.f32 %v1356, %v1359
  %vm1361 = vweird.f32 %v1355
  %vm1362 = vweird.f32 %v1356
  %vm1363 = vmor %vm1361, %vm1362
  %v1364 = vsel %vm1363, %v1356, %v1360
  %v1365 = vand.u32 2147483647, %v1355
  %vm1366 = vcmp.eq.f32.partialorder %v1365, 8.507059e+37
  %v1367 = vand.u32 %v1355, 2147483648
  %v1368 = vor.u32 1.1754944e-38, %v1367
  %v1369 = vsel %vm1366, %v1368, %v1364
  %v1370 = vmul.f32 1.0, %v1369
  %v1371 = vmul.f32 %v1370, 2.0
  %v1372 = vmul.f32 %v903, %v1371
  %v1373 = vmul.f32 %v904, %v1371
  %v1374 = vmul.f32 %v905, %v1371
  %v1375 = vmul.f32 %v906, %v1371
  %v1376 = vrot.slane %v1372, 4
  %v1377 = vadd.f32 %v1372, %v1376
  %v1378 = vrot.slane %v1377, 2
  %v1379 = vadd.f32 %v1377, %v1378
  %v1380 = vrot.slane %v1379, 1
  %v1381 = vadd.f32 %v1379, %v1380
  %v1382 = vrot.slane %v1373, 4
  %v1383 = vadd.f32 %v1373, %v1382
  %v1384 = vrot.slane %v1383, 2
  %v1385 = vadd.f32 %v1383, %v1384
  %v1386 = vrot.slane %v1385, 1
  %v1387 = vadd.f32 %v1385, %v1386
  %v1388 = vrot.slane %v1374, 4
  %v1389 = vadd.f32 %v1374, %v1388
  %v1390 = vrot.slane %v1389, 2
  %v1391 = vadd.f32 %v1389, %v1390
  %v1392 = vrot.slane %v1391, 1
  %v1393 = vadd.f32 %v1391, %v1392
  %v1394 = vrot.slane %v1375, 4
  %v1395 = vadd.f32 %v1375, %v1394
  %v1396 = vrot.slane %v1395, 2
  %v1397 = vadd.f32 %v1395, %v1396
  %v1398 = vrot.slane %v1397, 1
  %v1399 = vadd.f32 %v1397, %v1398
  %1401 = vset.pattern.permute.xlu0 0
  %1402 = vperm.xlu0 %1401, %v1351
  %v1403 = vpop.permute.xlu0 %1402
  %v1405 = vperm.slane %v1403, 0
  %v1406 = vadd.f32 %v1381, %v1405
  %v1407 = vadd.f32 %v1387, %v1405
  %v1408 = vadd.f32 %v1393, %v1405
  %v1409 = vadd.f32 %v1399, %v1405
  %vm1410 = vcmp.ge.f32.partialorder %v1406, 0.0
  %vm1411 = vcmp.ge.f32.partialorder %v1407, 0.0
  %vm1412 = vcmp.ge.f32.partialorder %v1408, 0.0
  %vm1413 = vcmp.ge.f32.partialorder %v1409, 0.0
  %vm1414 = vcmp.le.f32.partialorder %v1406, 1.0
  %vm1415 = vcmp.le.f32.partialorder %v1407, 1.0
  %vm1416 = vcmp.le.f32.partialorder %v1408, 1.0
  %vm1417 = vcmp.le.f32.partialorder %v1409, 1.0
  %vm1418 = vmand %vm1410, %vm1414
  %vm1419 = vmand %vm1411, %vm1415
  %vm1420 = vmand %vm1412, %vm1416
  %vm1421 = vmand %vm1413, %vm1417
  %v1422 = vsel %vm1418, %v967, 0.0
  %v1423 = vsel %vm1419, %v968, 0.0
  %v1424 = vsel %vm1420, %v969, 0.0
  %v1425 = vsel %vm1421, %v970, 0.0
  %v1426 = vperm.slane %v1422, 0
  %v1427 = vperm.slane %v1423, 0
  %v1428 = vperm.slane %v1424, 0
  %v1429 = vperm.slane %v1425, 0
  %v1430 = vmul.f32 %v903, %v1426
  %v1431 = vmul.f32 %v904, %v1427
  %v1432 = vmul.f32 %v905, %v1428
  %v1433 = vmul.f32 %v906, %v1429
  %v1434 = vadd.f32 %v1430, %v1431
  %v1435 = vadd.f32 %v1434, %v1432
  %v1436 = vadd.f32 %v1435, %v1433
  %1437 = vadd.xlane.f32.xlu0 %v1436
  %v1438 = vpop.xlane.xlu0 %1437
  %v1439 = vsub.f32 1.0, %v1370
  %v1440 = vmul.f32 %v1371, %v1439
  %v1441 = vmul.f32 %v1438, %v1440
  %v1442 = vmul.f32 %v1441, 0.1
  %v1443 = vsub.f32 %v1331, %v1442
  %v1444 = vsel %vm995, %v1422, 0.0
  %v1445 = vsel %vm995, %v1423, 0.0
  %v1446 = vadd.f32 %v1444, %v1445
  %v1447 = vsel %vm995, %v1424, 0.0
  %v1448 = vadd.f32 %v1446, %v1447
  %v1449 = vsel %vm995, %v1425, 0.0
  %v1450 = vadd.f32 %v1448, %v1449
  %1451 = vadd.xlane.f32.xlu0 %v1450
  %v1452 = vpop.xlane.xlu0 %1451
  %v1453 = vrot.slane %v1452, 4
  %v1454 = vadd.f32 %v1452, %v1453
  %v1455 = vrot.slane %v1454, 2
  %v1456 = vadd.f32 %v1454, %v1455
  %v1457 = vrot.slane %v1456, 1
  %v1458 = vadd.f32 %v1456, %v1457
  %s1459 = vtos %v1458
  %s1460 = smul.f32 %s1459, %s918
  %s1461 = smul.f32 %s1460, 0.1
  %v1462 = vstv %s1461
  %v1463 = vsub.f32 %v1351, %v1462
  %v1464 = vxor.u32 %v1443, 2147483648
  %v1465 = vmul.f32 %v1464, 1.442695
  %v1466 = vpow.pop %v1465
  %v1467 = vadd.f32 %v1466, 1.0
  %v1468 = vrcp.pop %v1467
  %v1469 = vmul.f32 %v1467, %v1468
  %v1470 = vsub.f32 1.0, %v1469
  %v1471 = vmul.f32 %v1468, %v1470
  %v1472 = vadd.f32 %v1468, %v1471
  %vm1473 = vweird.f32 %v1467
  %vm1474 = vweird.f32 %v1468
  %vm1475 = vmor %vm1473, %vm1474
  %v1476 = vsel %vm1475, %v1468, %v1472
  %v1477 = vand.u32 2147483647, %v1467
  %vm1478 = vcmp.eq.f32.partialorder %v1477, 8.507059e+37
  %v1479 = vand.u32 %v1467, 2147483648
  %v1480 = vor.u32 1.1754944e-38, %v1479
  %v1481 = vsel %vm1478, %v1480, %v1476
  %v1482 = vmul.f32 1.0, %v1481
  %v1483 = vmul.f32 %v1482, 2.0
  %v1484 = vmul.f32 %v903, %v1483
  %v1485 = vmul.f32 %v904, %v1483
  %v1486 = vmul.f32 %v905, %v1483
  %v1487 = vmul.f32 %v906, %v1483
  %v1488 = vrot.slane %v1484, 4
  %v1489 = vadd.f32 %v1484, %v1488
  %v1490 = vrot.slane %v1489, 2
  %v1491 = vadd.f32 %v1489, %v1490
  %v1492 = vrot.slane %v1491, 1
  %v1493 = vadd.f32 %v1491, %v1492
  %v1494 = vrot.slane %v1485, 4
  %v1495 = vadd.f32 %v1485, %v1494
  %v1496 = vrot.slane %v1495, 2
  %v1497 = vadd.f32 %v1495, %v1496
  %v1498 = vrot.slane %v1497, 1
  %v1499 = vadd.f32 %v1497, %v1498
  %v1500 = vrot.slane %v1486, 4
  %v1501 = vadd.f32 %v1486, %v1500
  %v1502 = vrot.slane %v1501, 2
  %v1503 = vadd.f32 %v1501, %v1502
  %v1504 = vrot.slane %v1503, 1
  %v1505 = vadd.f32 %v1503, %v1504
  %v1506 = vrot.slane %v1487, 4
  %v1507 = vadd.f32 %v1487, %v1506
  %v1508 = vrot.slane %v1507, 2
  %v1509 = vadd.f32 %v1507, %v1508
  %v1510 = vrot.slane %v1509, 1
  %v1511 = vadd.f32 %v1509, %v1510
  %1513 = vset.pattern.permute.xlu0 0
  %1514 = vperm.xlu0 %1513, %v1463
  %v1515 = vpop.permute.xlu0 %1514
  %v1517 = vperm.slane %v1515, 0
  %v1518 = vadd.f32 %v1493, %v1517
  %v1519 = vadd.f32 %v1499, %v1517
  %v1520 = vadd.f32 %v1505, %v1517
  %v1521 = vadd.f32 %v1511, %v1517
  %vm1522 = vcmp.ge.f32.partialorder %v1518, 0.0
  %vm1523 = vcmp.ge.f32.partialorder %v1519, 0.0
  %vm1524 = vcmp.ge.f32.partialorder %v1520, 0.0
  %vm1525 = vcmp.ge.f32.partialorder %v1521, 0.0
  %vm1526 = vcmp.le.f32.partialorder %v1518, 1.0
  %vm1527 = vcmp.le.f32.partialorder %v1519, 1.0
  %vm1528 = vcmp.le.f32.partialorder %v1520, 1.0
  %vm1529 = vcmp.le.f32.partialorder %v1521, 1.0
  %vm1530 = vmand %vm1522, %vm1526
  %vm1531 = vmand %vm1523, %vm1527
  %vm1532 = vmand %vm1524, %vm1528
  %vm1533 = vmand %vm1525, %vm1529
  %v1534 = vsel %vm1530, %v967, 0.0
  %v1535 = vsel %vm1531, %v968, 0.0
  %v1536 = vsel %vm1532, %v969, 0.0
  %v1537 = vsel %vm1533, %v970, 0.0
  %v1538 = vperm.slane %v1534, 0
  %v1539 = vperm.slane %v1535, 0
  %v1540 = vperm.slane %v1536, 0
  %v1541 = vperm.slane %v1537, 0
  %v1542 = vmul.f32 %v903, %v1538
  %v1543 = vmul.f32 %v904, %v1539
  %v1544 = vmul.f32 %v905, %v1540
  %v1545 = vmul.f32 %v906, %v1541
  %v1546 = vadd.f32 %v1542, %v1543
  %v1547 = vadd.f32 %v1546, %v1544
  %v1548 = vadd.f32 %v1547, %v1545
  %1549 = vadd.xlane.f32.xlu0 %v1548
  %v1550 = vpop.xlane.xlu0 %1549
  %v1551 = vsub.f32 1.0, %v1482
  %v1552 = vmul.f32 %v1483, %v1551
  %v1553 = vmul.f32 %v1550, %v1552
  %v1554 = vmul.f32 %v1553, 0.1
  %v1555 = vsub.f32 %v1443, %v1554
  %v1556 = vsel %vm995, %v1534, 0.0
  %v1557 = vsel %vm995, %v1535, 0.0
  %v1558 = vadd.f32 %v1556, %v1557
  %v1559 = vsel %vm995, %v1536, 0.0
  %v1560 = vadd.f32 %v1558, %v1559
  %v1561 = vsel %vm995, %v1537, 0.0
  %v1562 = vadd.f32 %v1560, %v1561
  %1563 = vadd.xlane.f32.xlu0 %v1562
  %v1564 = vpop.xlane.xlu0 %1563
  %v1565 = vrot.slane %v1564, 4
  %v1566 = vadd.f32 %v1564, %v1565
  %v1567 = vrot.slane %v1566, 2
  %v1568 = vadd.f32 %v1566, %v1567
  %v1569 = vrot.slane %v1568, 1
  %v1570 = vadd.f32 %v1568, %v1569
  %s1571 = vtos %v1570
  %s1572 = smul.f32 %s1571, %s918
  %s1573 = smul.f32 %s1572, 0.1
  %v1574 = vstv %s1573
  %v1575 = vsub.f32 %v1463, %v1574
  %v1576 = vxor.u32 %v1555, 2147483648
  %v1577 = vmul.f32 %v1576, 1.442695
  %v1578 = vpow.pop %v1577
  %v1579 = vadd.f32 %v1578, 1.0
  %v1580 = vrcp.pop %v1579
  %v1581 = vmul.f32 %v1579, %v1580
  %v1582 = vsub.f32 1.0, %v1581
  %v1583 = vmul.f32 %v1580, %v1582
  %v1584 = vadd.f32 %v1580, %v1583
  %vm1585 = vweird.f32 %v1579
  %vm1586 = vweird.f32 %v1580
  %vm1587 = vmor %vm1585, %vm1586
  %v1588 = vsel %vm1587, %v1580, %v1584
  %v1589 = vand.u32 2147483647, %v1579
  %vm1590 = vcmp.eq.f32.partialorder %v1589, 8.507059e+37
  %v1591 = vand.u32 %v1579, 2147483648
  %v1592 = vor.u32 1.1754944e-38, %v1591
  %v1593 = vsel %vm1590, %v1592, %v1588
  %v1594 = vmul.f32 1.0, %v1593
  %v1595 = vmul.f32 %v1594, 2.0
  %v1596 = vmul.f32 %v903, %v1595
  %v1597 = vmul.f32 %v904, %v1595
  %v1598 = vmul.f32 %v905, %v1595
  %v1599 = vmul.f32 %v906, %v1595
  %v1600 = vrot.slane %v1596, 4
  %v1601 = vadd.f32 %v1596, %v1600
  %v1602 = vrot.slane %v1601, 2
  %v1603 = vadd.f32 %v1601, %v1602
  %v1604 = vrot.slane %v1603, 1
  %v1605 = vadd.f32 %v1603, %v1604
  %v1606 = vrot.slane %v1597, 4
  %v1607 = vadd.f32 %v1597, %v1606
  %v1608 = vrot.slane %v1607, 2
  %v1609 = vadd.f32 %v1607, %v1608
  %v1610 = vrot.slane %v1609, 1
  %v1611 = vadd.f32 %v1609, %v1610
  %v1612 = vrot.slane %v1598, 4
  %v1613 = vadd.f32 %v1598, %v1612
  %v1614 = vrot.slane %v1613, 2
  %v1615 = vadd.f32 %v1613, %v1614
  %v1616 = vrot.slane %v1615, 1
  %v1617 = vadd.f32 %v1615, %v1616
  %v1618 = vrot.slane %v1599, 4
  %v1619 = vadd.f32 %v1599, %v1618
  %v1620 = vrot.slane %v1619, 2
  %v1621 = vadd.f32 %v1619, %v1620
  %v1622 = vrot.slane %v1621, 1
  %v1623 = vadd.f32 %v1621, %v1622
  %1625 = vset.pattern.permute.xlu0 0
  %1626 = vperm.xlu0 %1625, %v1575
  %v1627 = vpop.permute.xlu0 %1626
  %v1629 = vperm.slane %v1627, 0
  %v1630 = vadd.f32 %v1605, %v1629
  %v1631 = vadd.f32 %v1611, %v1629
  %v1632 = vadd.f32 %v1617, %v1629
  %v1633 = vadd.f32 %v1623, %v1629
  %vm1634 = vcmp.ge.f32.partialorder %v1630, 0.0
  %vm1635 = vcmp.ge.f32.partialorder %v1631, 0.0
  %vm1636 = vcmp.ge.f32.partialorder %v1632, 0.0
  %vm1637 = vcmp.ge.f32.partialorder %v1633, 0.0
  %vm1638 = vcmp.le.f32.partialorder %v1630, 1.0
  %vm1639 = vcmp.le.f32.partialorder %v1631, 1.0
  %vm1640 = vcmp.le.f32.partialorder %v1632, 1.0
  %vm1641 = vcmp.le.f32.partialorder %v1633, 1.0
  %vm1642 = vmand %vm1634, %vm1638
  %vm1643 = vmand %vm1635, %vm1639
  %vm1644 = vmand %vm1636, %vm1640
  %vm1645 = vmand %vm1637, %vm1641
  %v1646 = vsel %vm1642, %v967, 0.0
  %v1647 = vsel %vm1643, %v968, 0.0
  %v1648 = vsel %vm1644, %v969, 0.0
  %v1649 = vsel %vm1645, %v970, 0.0
  %v1650 = vperm.slane %v1646, 0
  %v1651 = vperm.slane %v1647, 0
  %v1652 = vperm.slane %v1648, 0
  %v1653 = vperm.slane %v1649, 0
  %v1654 = vmul.f32 %v903, %v1650
  %v1655 = vmul.f32 %v904, %v1651
  %v1656 = vmul.f32 %v905, %v1652
  %v1657 = vmul.f32 %v906, %v1653
  %v1658 = vadd.f32 %v1654, %v1655
  %v1659 = vadd.f32 %v1658, %v1656
  %v1660 = vadd.f32 %v1659, %v1657
  %1661 = vadd.xlane.f32.xlu0 %v1660
  %v1662 = vpop.xlane.xlu0 %1661
  %v1663 = vsub.f32 1.0, %v1594
  %v1664 = vmul.f32 %v1595, %v1663
  %v1665 = vmul.f32 %v1662, %v1664
  %v1666 = vmul.f32 %v1665, 0.1
  %v1667 = vsub.f32 %v1555, %v1666
  %v1668 = vsel %vm995, %v1646, 0.0
  %v1669 = vsel %vm995, %v1647, 0.0
  %v1670 = vadd.f32 %v1668, %v1669
  %v1671 = vsel %vm995, %v1648, 0.0
  %v1672 = vadd.f32 %v1670, %v1671
  %v1673 = vsel %vm995, %v1649, 0.0
  %v1674 = vadd.f32 %v1672, %v1673
  %1675 = vadd.xlane.f32.xlu0 %v1674
  %v1676 = vpop.xlane.xlu0 %1675
  %v1677 = vrot.slane %v1676, 4
  %v1678 = vadd.f32 %v1676, %v1677
  %v1679 = vrot.slane %v1678, 2
  %v1680 = vadd.f32 %v1678, %v1679
  %v1681 = vrot.slane %v1680, 1
  %v1682 = vadd.f32 %v1680, %v1681
  %s1683 = vtos %v1682
  %s1684 = smul.f32 %s1683, %s918
  %s1685 = smul.f32 %s1684, 0.1
  %v1686 = vstv %s1685
  %v1687 = vsub.f32 %v1575, %v1686
  %v1688 = vxor.u32 %v1667, 2147483648
  %v1689 = vmul.f32 %v1688, 1.442695
  %v1690 = vpow.pop %v1689
  %v1691 = vadd.f32 %v1690, 1.0
  %v1692 = vrcp.pop %v1691
  %v1693 = vmul.f32 %v1691, %v1692
  %v1694 = vsub.f32 1.0, %v1693
  %v1695 = vmul.f32 %v1692, %v1694
  %v1696 = vadd.f32 %v1692, %v1695
  %vm1697 = vweird.f32 %v1691
  %vm1698 = vweird.f32 %v1692
  %vm1699 = vmor %vm1697, %vm1698
  %v1700 = vsel %vm1699, %v1692, %v1696
  %v1701 = vand.u32 2147483647, %v1691
  %vm1702 = vcmp.eq.f32.partialorder %v1701, 8.507059e+37
  %v1703 = vand.u32 %v1691, 2147483648
  %v1704 = vor.u32 1.1754944e-38, %v1703
  %v1705 = vsel %vm1702, %v1704, %v1700
  %v1706 = vmul.f32 1.0, %v1705
  %v1707 = vmul.f32 %v1706, 2.0
  %v1708 = vmul.f32 %v903, %v1707
  %v1709 = vmul.f32 %v904, %v1707
  %v1710 = vmul.f32 %v905, %v1707
  %v1711 = vmul.f32 %v906, %v1707
  %v1712 = vrot.slane %v1708, 4
  %v1713 = vadd.f32 %v1708, %v1712
  %v1714 = vrot.slane %v1713, 2
  %v1715 = vadd.f32 %v1713, %v1714
  %v1716 = vrot.slane %v1715, 1
  %v1717 = vadd.f32 %v1715, %v1716
  %v1718 = vrot.slane %v1709, 4
  %v1719 = vadd.f32 %v1709, %v1718
  %v1720 = vrot.slane %v1719, 2
  %v1721 = vadd.f32 %v1719, %v1720
  %v1722 = vrot.slane %v1721, 1
  %v1723 = vadd.f32 %v1721, %v1722
  %v1724 = vrot.slane %v1710, 4
  %v1725 = vadd.f32 %v1710, %v1724
  %v1726 = vrot.slane %v1725, 2
  %v1727 = vadd.f32 %v1725, %v1726
  %v1728 = vrot.slane %v1727, 1
  %v1729 = vadd.f32 %v1727, %v1728
  %v1730 = vrot.slane %v1711, 4
  %v1731 = vadd.f32 %v1711, %v1730
  %v1732 = vrot.slane %v1731, 2
  %v1733 = vadd.f32 %v1731, %v1732
  %v1734 = vrot.slane %v1733, 1
  %v1735 = vadd.f32 %v1733, %v1734
  %1737 = vset.pattern.permute.xlu0 0
  %1738 = vperm.xlu0 %1737, %v1687
  %v1739 = vpop.permute.xlu0 %1738
  %v1741 = vperm.slane %v1739, 0
  %v1742 = vadd.f32 %v1717, %v1741
  %v1743 = vadd.f32 %v1723, %v1741
  %v1744 = vadd.f32 %v1729, %v1741
  %v1745 = vadd.f32 %v1735, %v1741
  %vm1746 = vcmp.ge.f32.partialorder %v1742, 0.0
  %vm1747 = vcmp.ge.f32.partialorder %v1743, 0.0
  %vm1748 = vcmp.ge.f32.partialorder %v1744, 0.0
  %vm1749 = vcmp.ge.f32.partialorder %v1745, 0.0
  %vm1750 = vcmp.le.f32.partialorder %v1742, 1.0
  %vm1751 = vcmp.le.f32.partialorder %v1743, 1.0
  %vm1752 = vcmp.le.f32.partialorder %v1744, 1.0
  %vm1753 = vcmp.le.f32.partialorder %v1745, 1.0
  %vm1754 = vmand %vm1746, %vm1750
  %vm1755 = vmand %vm1747, %vm1751
  %vm1756 = vmand %vm1748, %vm1752
  %vm1757 = vmand %vm1749, %vm1753
  %v1758 = vsel %vm1754, %v967, 0.0
  %v1759 = vsel %vm1755, %v968, 0.0
  %v1760 = vsel %vm1756, %v969, 0.0
  %v1761 = vsel %vm1757, %v970, 0.0
  %v1762 = vperm.slane %v1758, 0
  %v1763 = vperm.slane %v1759, 0
  %v1764 = vperm.slane %v1760, 0
  %v1765 = vperm.slane %v1761, 0
  %v1766 = vmul.f32 %v903, %v1762
  %v1767 = vmul.f32 %v904, %v1763
  %v1768 = vmul.f32 %v905, %v1764
  %v1769 = vmul.f32 %v906, %v1765
  %v1770 = vadd.f32 %v1766, %v1767
  %v1771 = vadd.f32 %v1770, %v1768
  %v1772 = vadd.f32 %v1771, %v1769
  %1773 = vadd.xlane.f32.xlu0 %v1772
  %v1774 = vpop.xlane.xlu0 %1773
  %v1775 = vsub.f32 1.0, %v1706
  %v1776 = vmul.f32 %v1707, %v1775
  %v1777 = vmul.f32 %v1774, %v1776
  %v1778 = vmul.f32 %v1777, 0.1
  %v1779 = vsub.f32 %v1667, %v1778
  %v1780 = vsel %vm995, %v1758, 0.0
  %v1781 = vsel %vm995, %v1759, 0.0
  %v1782 = vadd.f32 %v1780, %v1781
  %v1783 = vsel %vm995, %v1760, 0.0
  %v1784 = vadd.f32 %v1782, %v1783
  %v1785 = vsel %vm995, %v1761, 0.0
  %v1786 = vadd.f32 %v1784, %v1785
  %1787 = vadd.xlane.f32.xlu0 %v1786
  %v1788 = vpop.xlane.xlu0 %1787
  %v1789 = vrot.slane %v1788, 4
  %v1790 = vadd.f32 %v1788, %v1789
  %v1791 = vrot.slane %v1790, 2
  %v1792 = vadd.f32 %v1790, %v1791
  %v1793 = vrot.slane %v1792, 1
  %v1794 = vadd.f32 %v1792, %v1793
  %s1795 = vtos %v1794
  %s1796 = smul.f32 %s1795, %s918
  %s1797 = smul.f32 %s1796, 0.1
  %v1798 = vstv %s1797
  %v1799 = vsub.f32 %v1687, %v1798
  %v1800 = vxor.u32 %v1779, 2147483648
  %v1801 = vmul.f32 %v1800, 1.442695
  %v1802 = vpow.pop %v1801
  %v1803 = vadd.f32 %v1802, 1.0
  %v1804 = vrcp.pop %v1803
  %v1805 = vmul.f32 %v1803, %v1804
  %v1806 = vsub.f32 1.0, %v1805
  %v1807 = vmul.f32 %v1804, %v1806
  %v1808 = vadd.f32 %v1804, %v1807
  %vm1809 = vweird.f32 %v1803
  %vm1810 = vweird.f32 %v1804
  %vm1811 = vmor %vm1809, %vm1810
  %v1812 = vsel %vm1811, %v1804, %v1808
  %v1813 = vand.u32 2147483647, %v1803
  %vm1814 = vcmp.eq.f32.partialorder %v1813, 8.507059e+37
  %v1815 = vand.u32 %v1803, 2147483648
  %v1816 = vor.u32 1.1754944e-38, %v1815
  %v1817 = vsel %vm1814, %v1816, %v1812
  %v1818 = vmul.f32 1.0, %v1817
  %v1819 = vmul.f32 %v1818, 2.0
  %v1820 = vmul.f32 %v903, %v1819
  %v1821 = vmul.f32 %v904, %v1819
  %v1822 = vmul.f32 %v905, %v1819
  %v1823 = vmul.f32 %v906, %v1819
  %v1824 = vrot.slane %v1820, 4
  %v1825 = vadd.f32 %v1820, %v1824
  %v1826 = vrot.slane %v1825, 2
  %v1827 = vadd.f32 %v1825, %v1826
  %v1828 = vrot.slane %v1827, 1
  %v1829 = vadd.f32 %v1827, %v1828
  %v1830 = vrot.slane %v1821, 4
  %v1831 = vadd.f32 %v1821, %v1830
  %v1832 = vrot.slane %v1831, 2
  %v1833 = vadd.f32 %v1831, %v1832
  %v1834 = vrot.slane %v1833, 1
  %v1835 = vadd.f32 %v1833, %v1834
  %v1836 = vrot.slane %v1822, 4
  %v1837 = vadd.f32 %v1822, %v1836
  %v1838 = vrot.slane %v1837, 2
  %v1839 = vadd.f32 %v1837, %v1838
  %v1840 = vrot.slane %v1839, 1
  %v1841 = vadd.f32 %v1839, %v1840
  %v1842 = vrot.slane %v1823, 4
  %v1843 = vadd.f32 %v1823, %v1842
  %v1844 = vrot.slane %v1843, 2
  %v1845 = vadd.f32 %v1843, %v1844
  %v1846 = vrot.slane %v1845, 1
  %v1847 = vadd.f32 %v1845, %v1846
  %1849 = vset.pattern.permute.xlu0 0
  %1850 = vperm.xlu0 %1849, %v1799
  %v1851 = vpop.permute.xlu0 %1850
  %v1853 = vperm.slane %v1851, 0
  %v1854 = vadd.f32 %v1829, %v1853
  %v1855 = vadd.f32 %v1835, %v1853
  %v1856 = vadd.f32 %v1841, %v1853
  %v1857 = vadd.f32 %v1847, %v1853
  %vm1858 = vcmp.ge.f32.partialorder %v1854, 0.0
  %vm1859 = vcmp.ge.f32.partialorder %v1855, 0.0
  %vm1860 = vcmp.ge.f32.partialorder %v1856, 0.0
  %vm1861 = vcmp.ge.f32.partialorder %v1857, 0.0
  %vm1862 = vcmp.le.f32.partialorder %v1854, 1.0
  %vm1863 = vcmp.le.f32.partialorder %v1855, 1.0
  %vm1864 = vcmp.le.f32.partialorder %v1856, 1.0
  %vm1865 = vcmp.le.f32.partialorder %v1857, 1.0
  %vm1866 = vmand %vm1858, %vm1862
  %vm1867 = vmand %vm1859, %vm1863
  %vm1868 = vmand %vm1860, %vm1864
  %vm1869 = vmand %vm1861, %vm1865
  %v1870 = vsel %vm1866, %v967, 0.0
  %v1871 = vsel %vm1867, %v968, 0.0
  %v1872 = vsel %vm1868, %v969, 0.0
  %v1873 = vsel %vm1869, %v970, 0.0
  %v1874 = vperm.slane %v1870, 0
  %v1875 = vperm.slane %v1871, 0
  %v1876 = vperm.slane %v1872, 0
  %v1877 = vperm.slane %v1873, 0
  %v1878 = vmul.f32 %v903, %v1874
  %v1879 = vmul.f32 %v904, %v1875
  %v1880 = vmul.f32 %v905, %v1876
  %v1881 = vmul.f32 %v906, %v1877
  %v1882 = vadd.f32 %v1878, %v1879
  %v1883 = vadd.f32 %v1882, %v1880
  %v1884 = vadd.f32 %v1883, %v1881
  %1885 = vadd.xlane.f32.xlu0 %v1884
  %v1886 = vpop.xlane.xlu0 %1885
  %v1887 = vsub.f32 1.0, %v1818
  %v1888 = vmul.f32 %v1819, %v1887
  %v1889 = vmul.f32 %v1886, %v1888
  %v1890 = vmul.f32 %v1889, 0.1
  %v1891 = vsub.f32 %v1779, %v1890
  %v1892 = vsel %vm995, %v1870, 0.0
  %v1893 = vsel %vm995, %v1871, 0.0
  %v1894 = vadd.f32 %v1892, %v1893
  %v1895 = vsel %vm995, %v1872, 0.0
  %v1896 = vadd.f32 %v1894, %v1895
  %v1897 = vsel %vm995, %v1873, 0.0
  %v1898 = vadd.f32 %v1896, %v1897
  %1899 = vadd.xlane.f32.xlu0 %v1898
  %v1900 = vpop.xlane.xlu0 %1899
  %v1901 = vrot.slane %v1900, 4
  %v1902 = vadd.f32 %v1900, %v1901
  %v1903 = vrot.slane %v1902, 2
  %v1904 = vadd.f32 %v1902, %v1903
  %v1905 = vrot.slane %v1904, 1
  %v1906 = vadd.f32 %v1904, %v1905
  %s1907 = vtos %v1906
  %s1908 = smul.f32 %s1907, %s918
  %s1909 = smul.f32 %s1908, 0.1
  %v1910 = vstv %s1909
  %v1911 = vsub.f32 %v1799, %v1910
  %v1912 = vxor.u32 %v1891, 2147483648
  %v1913 = vmul.f32 %v1912, 1.442695
  %v1914 = vpow.pop %v1913
  %v1915 = vadd.f32 %v1914, 1.0
  %v1916 = vrcp.pop %v1915
  %v1917 = vmul.f32 %v1915, %v1916
  %v1918 = vsub.f32 1.0, %v1917
  %v1919 = vmul.f32 %v1916, %v1918
  %v1920 = vadd.f32 %v1916, %v1919
  %vm1921 = vweird.f32 %v1915
  %vm1922 = vweird.f32 %v1916
  %vm1923 = vmor %vm1921, %vm1922
  %v1924 = vsel %vm1923, %v1916, %v1920
  %v1925 = vand.u32 2147483647, %v1915
  %vm1926 = vcmp.eq.f32.partialorder %v1925, 8.507059e+37
  %v1927 = vand.u32 %v1915, 2147483648
  %v1928 = vor.u32 1.1754944e-38, %v1927
  %v1929 = vsel %vm1926, %v1928, %v1924
  %v1930 = vmul.f32 1.0, %v1929
  %v1931 = vmul.f32 %v1930, 2.0
  %v1932 = vmul.f32 %v903, %v1931
  %v1933 = vmul.f32 %v904, %v1931
  %v1934 = vmul.f32 %v905, %v1931
  %v1935 = vmul.f32 %v906, %v1931
  %v1936 = vrot.slane %v1932, 4
  %v1937 = vadd.f32 %v1932, %v1936
  %v1938 = vrot.slane %v1937, 2
  %v1939 = vadd.f32 %v1937, %v1938
  %v1940 = vrot.slane %v1939, 1
  %v1941 = vadd.f32 %v1939, %v1940
  %v1942 = vrot.slane %v1933, 4
  %v1943 = vadd.f32 %v1933, %v1942
  %v1944 = vrot.slane %v1943, 2
  %v1945 = vadd.f32 %v1943, %v1944
  %v1946 = vrot.slane %v1945, 1
  %v1947 = vadd.f32 %v1945, %v1946
  %v1948 = vrot.slane %v1934, 4
  %v1949 = vadd.f32 %v1934, %v1948
  %v1950 = vrot.slane %v1949, 2
  %v1951 = vadd.f32 %v1949, %v1950
  %v1952 = vrot.slane %v1951, 1
  %v1953 = vadd.f32 %v1951, %v1952
  %v1954 = vrot.slane %v1935, 4
  %v1955 = vadd.f32 %v1935, %v1954
  %v1956 = vrot.slane %v1955, 2
  %v1957 = vadd.f32 %v1955, %v1956
  %v1958 = vrot.slane %v1957, 1
  %v1959 = vadd.f32 %v1957, %v1958
  %1961 = vset.pattern.permute.xlu0 0
  %1962 = vperm.xlu0 %1961, %v1911
  %v1963 = vpop.permute.xlu0 %1962
  %v1965 = vperm.slane %v1963, 0
  %v1966 = vadd.f32 %v1941, %v1965
  %v1967 = vadd.f32 %v1947, %v1965
  %v1968 = vadd.f32 %v1953, %v1965
  %v1969 = vadd.f32 %v1959, %v1965
  %v1970 = vmax.f32 %v1966, 0.0
  %v1971 = vmax.f32 %v1967, 0.0
  %v1972 = vmax.f32 %v1968, 0.0
  %v1973 = vmax.f32 %v1969, 0.0
  %v1974 = vmin.f32 %v1970, 1.0
  %v1975 = vmin.f32 %v1971, 1.0
  %v1976 = vmin.f32 %v1972, 1.0
  %v1977 = vmin.f32 %v1973, 1.0
  %v1982 = vrot.slane %v1975, 7
  %v1983 = vrot.slane %v1976, 6
  %v1984 = vrot.slane %v1977, 5
  %v1985 = vsel %vm995, %v1974, %v1982
  %vm1986 = vcmask 1042434
  %v1987 = vsel %vm1986, %v1983, %v1984
  %vm1988 = vcmask 1041408
  %v1989 = vsel %vm1988, %v1985, %v1987
  %vm1991 = vcmp.lt.s32.totalorder %v493, 512
  %vm1992 = vmand %vm494, %vm1991
  %1993 = vst.msk [vmem:[%s7] sm:$0xf] %vm1992, %v1989
  // Predicated region
  $region30: #{test_time_model_forward.1} parent=0 // pred_check
    _
  $region31: #{test_time_model_forward.1} parent=0 // pred_check_branch
    %1995 = sbr.rel (0) target = $region33
  $region32: #{test_time_model_forward.1} parent=0 // pred_region
    _
  $region33: #{test_time_model_forward.1} parent=0 // pred_fallthru
    _
  // Predicated region
  $region34: #{test_time_model_forward.1} parent=0 // pred_check
    _
  $region35: #{test_time_model_forward.1} parent=0 // pred_check_branch
    %1997 = sbr.rel (0) target = $region37
  $region36: #{test_time_model_forward.1} parent=0 // pred_region
    _
  $region37: #{test_time_model_forward.1} parent=0 // pred_fallthru
    _

</llo_original>
